<compile_context>
chip_gen: v5e
topology: v5e:2x2
jax: 0.10.0
libtpu: 0.0.40
codegen_flags: <defaults>
</compile_context>

<pallas_src>
import functools

import jax
import jax.numpy as jnp
from jax import lax
from jax.experimental import pallas as pl
from jax.experimental.pallas import tpu as pltpu


def _mhatt_kernel(n_head, d_k, d_v, d_model, eps,
                  qT_ref, kT_ref, vT_ref,
                  wq_ref, wk_ref, wv_ref, wfc_ref,
                  gamma_ref, beta_ref,
                  outT_ref, attnT_ref):
    f32 = jnp.float32
    inv_temp = 1.0 / (float(d_k) ** 0.5)
    TL = qT_ref.shape[1]                       # seq tile, lane axis (mult of 128)

    qT = qT_ref[...]                           # (d_model, TL), compute dtype

    # --- projections, transposed layout: one lane-dense MXU matmul each --------
    # qpT[r, l] = (q @ Wq^T)[l, r]   (Wq is the raw nn.Linear weight)
    qpT = jnp.dot(wq_ref[...], qT, preferred_element_type=f32) * inv_temp
    kpT = jnp.dot(wk_ref[...], kT_ref[...], preferred_element_type=f32)
    vpT = jnp.dot(wv_ref[...], vT_ref[...], preferred_element_type=f32)

    # --- head-contracted scores: scores[d, e, l] = sum_h qpT[h*dk+d,l]*kpT[h*dk+e,l]
    # contraction length = n_head (tiny) -> VPU broadcast-multiply, all 128 lanes.
    scores = jnp.zeros((d_k, d_k, TL), f32)
    for h in range(n_head):
        q_h = qpT[h * d_k:(h + 1) * d_k, :]    # (d_k, TL)
        k_h = kpT[h * d_k:(h + 1) * d_k, :]    # (d_k, TL)
        scores = scores + q_h[:, None, :] * k_h[None, :, :]

    # --- softmax over the e axis (axis=1), mask=None path ----------------------
    # TODO(synk): optional attention mask path not implemented (module default).
    m = jnp.max(scores, axis=1, keepdims=True)          # (d_k, 1, TL)
    e = jnp.exp(scores - m)
    denom = jnp.sum(e, axis=1, keepdims=True)           # (d_k, 1, TL)
    attn = e * (1.0 / denom)                             # divide only on small tensor
    # TODO(synk): attention dropout (p=0.1) is stochastic; eval-mode identity.
    # (d_k, d_k, TL) -> (d_k*d_k, TL): tile-aligned collapse, single lane-dense store
    attnT_ref[...] = attn.reshape(d_k * d_k, TL)

    # --- attn @ v per head, kept in registers (no VMEM scratch) ----------------
    # oT[h*d_k + d, l] = sum_e attn[d, e, l] * vpT[h*d_v + e, l]
    o_heads = []
    for h in range(n_head):
        v_h = vpT[h * d_v:(h + 1) * d_v, :]              # (d_v, TL)
        o_heads.append(jnp.sum(attn * v_h[None, :, :], axis=1))   # (d_k, TL)
    oT = jnp.concatenate(o_heads, axis=0)                # (H*d_v, TL)

    # --- fc matmul + residual + LayerNorm (all lane-dense) ---------------------
    fcT = jnp.dot(wfc_ref[...].astype(f32), oT, preferred_element_type=f32)
    # TODO(synk): output dropout (p=0.3) is stochastic; eval-mode identity.
    y = fcT + qT.astype(f32)                             # (d_model, TL)
    inv_d = 1.0 / float(d_model)
    mu = jnp.sum(y, axis=0, keepdims=True) * inv_d       # (1, TL)
    yc = y - mu
    var = jnp.sum(yc * yc, axis=0, keepdims=True) * inv_d
    yn = yc * lax.rsqrt(var + eps)
    outT_ref[...] = (yn * gamma_ref[...] + beta_ref[...]).astype(outT_ref.dtype)


def mhatt_forward(q, k, v, wq, wk, wv, wfc, gamma, beta, *,
                  n_head, d_k, d_v, block_l=None,
                  compute_dtype=jnp.bfloat16):
    """q/k/v: [L, d_model]; wq/wk: [d_model, H*d_k]; wv: [d_model, H*d_v];
    wfc: [H*d_v, d_model]; gamma/beta: [1, d_model].

    Streamed operands are cast to `compute_dtype` (default bf16); all post-matmul
    math and both outputs are f32.  block_l is the sequence tile (lane axis);
    keep it a multiple of 128 (or == L) and prefer L/block_l >= 2 on v7x.
    """
    L, d_model = q.shape
    assert d_k == d_v, "this module's attn @ v step requires d_k == d_v"
    assert wq.shape == (d_model, n_head * d_k)
    assert wk.shape == (d_model, n_head * d_k)
    assert wv.shape == (d_model, n_head * d_v)
    assert wfc.shape == (n_head * d_v, d_model)
    if block_l is None:
        block_l = min(L, 512)
    assert L % block_l == 0, "sequence length must be a multiple of block_l"
    assert block_l == L or block_l % 128 == 0, \
        "block_l must be a multiple of 128 (lane-dense tiles) or equal L"

    cd = compute_dtype
    # Wrapper-side layout plumbing: put the sequence dim on the lane axis.
    qT = q.T.astype(cd)                        # (d_model, L)
    kT = k.T.astype(cd)
    vT = v.T.astype(cd)
    wqT = wq.T.astype(cd)                      # (H*d_k, d_model) == raw nn.Linear weight
    wkT = wk.T.astype(cd)
    wvT = wv.T.astype(cd)
    wfcT = wfc.T.astype(cd)                    # (d_model, H*d_v) == raw nn.Linear weight
    gammaT = gamma.reshape(d_model, 1).astype(jnp.float32)
    betaT = beta.reshape(d_model, 1).astype(jnp.float32)

    kernel = functools.partial(_mhatt_kernel, n_head, d_k, d_v, d_model, 1e-6)
    grid = (L // block_l,)

    def seq_map(i):
        return (0, i)

    def const_map(i):
        return (0, 0)

    in_specs = [
        pl.BlockSpec((d_model, block_l), seq_map),           # q^T
        pl.BlockSpec((d_model, block_l), seq_map),           # k^T
        pl.BlockSpec((d_model, block_l), seq_map),           # v^T
        pl.BlockSpec((n_head * d_k, d_model), const_map),    # Wq (resident)
        pl.BlockSpec((n_head * d_k, d_model), const_map),    # Wk (resident)
        pl.BlockSpec((n_head * d_v, d_model), const_map),    # Wv (resident)
        pl.BlockSpec((d_model, n_head * d_v), const_map),    # Wfc (resident)
        pl.BlockSpec((d_model, 1), const_map),               # gamma
        pl.BlockSpec((d_model, 1), const_map),               # beta
    ]
    out_specs = (
        pl.BlockSpec((d_model, block_l), seq_map),           # out^T
        pl.BlockSpec((d_k * d_k, block_l), seq_map),         # attn, (64, L) lane-dense
    )
    out_shape = (jax.ShapeDtypeStruct((d_model, L), jnp.float32),
                 jax.ShapeDtypeStruct((d_k * d_k, L), jnp.float32))

    outT, attnT = pl.pallas_call(
        kernel,
        grid=grid,
        in_specs=in_specs,
        out_specs=out_specs,
        out_shape=out_shape,
        compiler_params=pltpu.CompilerParams(
            # "parallel" lets the runtime shard sequence tiles across the two
            # v7x TensorCores; it's a no-op on single-core v5e/v6e.
            dimension_semantics=("parallel",)),
    )(qT, kT, vT, wqT, wkT, wvT, wfcT, gammaT, betaT)

    out = outT.T                                # (L, d_model)
    attn = attnT.T.reshape(L, d_k, d_k)         # [l, d, e]
    return out, attn


def mhatt_reference(q, k, v, wq, wk, wv, wfc, gamma, beta, *, n_head, d_k, d_v):
    """Pure-JAX transcription of the PyTorch forward (eval mode)."""
    L, d_model = q.shape
    temp = d_k ** 0.5
    q3 = (q @ wq).reshape(L, n_head, d_k).transpose(0, 2, 1)    # (L, d_k, H)
    k3 = (k @ wk).reshape(L, n_head, d_k).transpose(0, 2, 1)
    v3 = (v @ wv).reshape(L, n_head, d_v).transpose(0, 2, 1)
    attn = jnp.matmul(q3 / temp, jnp.transpose(k3, (0, 2, 1)))  # (L, d_k, d_k)
    attn = jax.nn.softmax(attn, axis=-1)
    o = jnp.matmul(attn, v3)                                    # (L, d_k, H)
    o = jnp.transpose(o, (0, 2, 1)).reshape(L, n_head * d_v)
    o = o @ wfc
    y = o + q
    mu = y.mean(-1, keepdims=True)
    var = ((y - mu) ** 2).mean(-1, keepdims=True)
    yn = (y - mu) / jnp.sqrt(var + 1e-6)
    return yn * gamma + beta, attn


if __name__ == "__main__":
    # d_k == d_v (module's attn @ v requires it).  L chosen so grid=(2,) exercises
    # the blocked, pipelined, 2-TC path while staying small.
    n_head, d_model, d_k, d_v, L = 4, 32, 8, 8, 256

    key = jax.random.PRNGKey(0)
    ks = jax.random.split(key, 9)
    q = jax.random.normal(ks[0], (L, d_model), jnp.float32)
    k = jax.random.normal(ks[1], (L, d_model), jnp.float32)
    v = jax.random.normal(ks[2], (L, d_model), jnp.float32)

    scale = 0.1
    wq = jax.random.normal(ks[3], (d_model, n_head * d_k), jnp.float32) * scale
    wk = jax.random.normal(ks[4], (d_model, n_head * d_k), jnp.float32) * scale
    wv = jax.random.normal(ks[5], (d_model, n_head * d_v), jnp.float32) * scale
    wfc = jax.random.normal(ks[6], (n_head * d_v, d_model), jnp.float32) * scale
    gamma = 1.0 + 0.1 * jax.random.normal(ks[7], (1, d_model), jnp.float32)
    beta = 0.1 * jax.random.normal(ks[8], (1, d_model), jnp.float32)

    # Default (perf) path: bf16 streaming.
    out16, attn16 = mhatt_forward(q, k, v, wq, wk, wv, wfc, gamma, beta,
                                  n_head=n_head, d_k=d_k, d_v=d_v,
                                  block_l=128, compute_dtype=jnp.bfloat16)
    # f32 path: strict parity with the pure-f32 reference.
    out32, attn32 = mhatt_forward(q, k, v, wq, wk, wv, wfc, gamma, beta,
                                  n_head=n_head, d_k=d_k, d_v=d_v,
                                  block_l=128, compute_dtype=jnp.float32)
    out16, attn16, out32, attn32 = jax.block_until_ready(
        (out16, attn16, out32, attn32))

    ref_out, ref_attn = mhatt_reference(q, k, v, wq, wk, wv, wfc, gamma, beta,
                                        n_head=n_head, d_k=d_k, d_v=d_v)
    # Reference fed the same bf16-rounded operands (bf16 is the intended perf
    # trade-off; the kernel's own math stays f32 after the dots).
    r = lambda x: x.astype(jnp.bfloat16).astype(jnp.float32)
    ref_out16, ref_attn16 = mhatt_reference(
        r(q), r(k), r(v), r(wq), r(wk), r(wv), r(wfc), gamma, beta,
        n_head=n_head, d_k=d_k, d_v=d_v)

    assert out32.shape == (L, d_model) and attn32.shape == (L, d_k, d_k)
    assert out16.shape == (L, d_model) and attn16.shape == (L, d_k, d_k)
    assert jnp.allclose(out32, ref_out, atol=2e-4, rtol=2e-4)
    assert jnp.allclose(attn32, ref_attn, atol=2e-4, rtol=2e-4)
    assert jnp.allclose(out16, ref_out16, atol=2e-3, rtol=2e-3)
    assert jnp.allclose(attn16, ref_attn16, atol=2e-3, rtol=2e-3)
    print("KERNEL_OK")
</pallas_src>

<mosaic_0001>
module attributes {stable_mosaic.version = 11 : i64} {
  func.func @_mhatt_kernel(%arg0: i32, %arg1: memref<32x128xbf16, #tpu.memory_space<vmem>>, %arg2: memref<32x128xbf16, #tpu.memory_space<vmem>>, %arg3: memref<32x128xbf16, #tpu.memory_space<vmem>>, %arg4: memref<32x32xbf16, #tpu.memory_space<vmem>>, %arg5: memref<32x32xbf16, #tpu.memory_space<vmem>>, %arg6: memref<32x32xbf16, #tpu.memory_space<vmem>>, %arg7: memref<32x32xbf16, #tpu.memory_space<vmem>>, %arg8: memref<32x1xf32, #tpu.memory_space<vmem>>, %arg9: memref<32x1xf32, #tpu.memory_space<vmem>>, %arg10: memref<32x128xf32, #tpu.memory_space<vmem>>, %arg11: memref<64x128xf32, #tpu.memory_space<vmem>>) attributes {dimension_semantics = [#tpu.dimension_semantics<parallel>], iteration_bounds = array<i64: 2>, scalar_prefetch = 0 : i64, scratch_operands = 0 : i64, tpu.core_type = #tpu.core_type<tc>, window_params = [{transform_indices = @transform_0, window_bounds = array<i64: 32, 128>}, {transform_indices = @transform_1, window_bounds = array<i64: 32, 128>}, {transform_indices = @transform_2, window_bounds = array<i64: 32, 128>}, {pipeline_mode = #tpu.pipeline_mode<synchronous>, transform_indices = @transform_3, window_bounds = array<i64: 32, 32>}, {pipeline_mode = #tpu.pipeline_mode<synchronous>, transform_indices = @transform_4, window_bounds = array<i64: 32, 32>}, {pipeline_mode = #tpu.pipeline_mode<synchronous>, transform_indices = @transform_5, window_bounds = array<i64: 32, 32>}, {pipeline_mode = #tpu.pipeline_mode<synchronous>, transform_indices = @transform_6, window_bounds = array<i64: 32, 32>}, {pipeline_mode = #tpu.pipeline_mode<synchronous>, transform_indices = @transform_7, window_bounds = array<i64: 32, 1>}, {pipeline_mode = #tpu.pipeline_mode<synchronous>, transform_indices = @transform_8, window_bounds = array<i64: 32, 1>}, {transform_indices = @transform_9, window_bounds = array<i64: 32, 128>}, {transform_indices = @transform_10, window_bounds = array<i64: 64, 128>}]} {
    %c0 = arith.constant 0 : index
    %c0_0 = arith.constant 0 : index
    %0 = vector.load %arg1[%c0, %c0_0] : memref<32x128xbf16, #tpu.memory_space<vmem>>, vector<32x128xbf16>
    %c0_1 = arith.constant 0 : index
    %c0_2 = arith.constant 0 : index
    %1 = vector.load %arg4[%c0_1, %c0_2] : memref<32x32xbf16, #tpu.memory_space<vmem>>, vector<32x32xbf16>
    %cst = arith.constant dense<0.000000e+00> : vector<32x128xf32>
    %2 = tpu.matmul %1, %0, %cst {dimension_numbers = #tpu.dot_dimension_numbers<[1], [0], [0], [1], [0, 0, 1, 1], [], []>} : vector<32x32xbf16>, vector<32x128xbf16>, vector<32x128xf32> -> vector<32x128xf32>
    %cst_3 = arith.constant 0.353553385 : f32
    %3 = vector.broadcast %cst_3 : f32 to vector<32x128xf32>
    %4 = arith.mulf %2, %3 : vector<32x128xf32>
    %c0_4 = arith.constant 0 : index
    %c0_5 = arith.constant 0 : index
    %5 = vector.load %arg5[%c0_4, %c0_5] : memref<32x32xbf16, #tpu.memory_space<vmem>>, vector<32x32xbf16>
    %c0_6 = arith.constant 0 : index
    %c0_7 = arith.constant 0 : index
    %6 = vector.load %arg2[%c0_6, %c0_7] : memref<32x128xbf16, #tpu.memory_space<vmem>>, vector<32x128xbf16>
    %cst_8 = arith.constant dense<0.000000e+00> : vector<32x128xf32>
    %7 = tpu.matmul %5, %6, %cst_8 {dimension_numbers = #tpu.dot_dimension_numbers<[1], [0], [0], [1], [0, 0, 1, 1], [], []>} : vector<32x32xbf16>, vector<32x128xbf16>, vector<32x128xf32> -> vector<32x128xf32>
    %c0_9 = arith.constant 0 : index
    %c0_10 = arith.constant 0 : index
    %8 = vector.load %arg6[%c0_9, %c0_10] : memref<32x32xbf16, #tpu.memory_space<vmem>>, vector<32x32xbf16>
    %c0_11 = arith.constant 0 : index
    %c0_12 = arith.constant 0 : index
    %9 = vector.load %arg3[%c0_11, %c0_12] : memref<32x128xbf16, #tpu.memory_space<vmem>>, vector<32x128xbf16>
    %cst_13 = arith.constant dense<0.000000e+00> : vector<32x128xf32>
    %10 = tpu.matmul %8, %9, %cst_13 {dimension_numbers = #tpu.dot_dimension_numbers<[1], [0], [0], [1], [0, 0, 1, 1], [], []>} : vector<32x32xbf16>, vector<32x128xbf16>, vector<32x128xf32> -> vector<32x128xf32>
    %cst_14 = arith.constant 0.000000e+00 : f32
    %11 = vector.broadcast %cst_14 : f32 to vector<8x8x128xf32>
    %12 = vector.extract_strided_slice %4 {offsets = [0, 0], sizes = [8, 128], strides = [1, 1]} : vector<32x128xf32> to vector<8x128xf32>
    %13 = vector.extract_strided_slice %7 {offsets = [0, 0], sizes = [8, 128], strides = [1, 1]} : vector<32x128xf32> to vector<8x128xf32>
    %14 = vector.shape_cast %12 : vector<8x128xf32> to vector<8x1x128xf32>
    %15 = vector.shape_cast %13 : vector<8x128xf32> to vector<1x8x128xf32>
    %16 = vector.broadcast %14 : vector<8x1x128xf32> to vector<8x8x128xf32>
    %17 = vector.broadcast %15 : vector<1x8x128xf32> to vector<8x8x128xf32>
    %18 = arith.mulf %16, %17 : vector<8x8x128xf32>
    %19 = arith.addf %11, %18 : vector<8x8x128xf32>
    %20 = vector.extract_strided_slice %4 {offsets = [8, 0], sizes = [8, 128], strides = [1, 1]} : vector<32x128xf32> to vector<8x128xf32>
    %21 = vector.extract_strided_slice %7 {offsets = [8, 0], sizes = [8, 128], strides = [1, 1]} : vector<32x128xf32> to vector<8x128xf32>
    %22 = vector.shape_cast %20 : vector<8x128xf32> to vector<8x1x128xf32>
    %23 = vector.shape_cast %21 : vector<8x128xf32> to vector<1x8x128xf32>
    %24 = vector.broadcast %22 : vector<8x1x128xf32> to vector<8x8x128xf32>
    %25 = vector.broadcast %23 : vector<1x8x128xf32> to vector<8x8x128xf32>
    %26 = arith.mulf %24, %25 : vector<8x8x128xf32>
    %27 = arith.addf %19, %26 : vector<8x8x128xf32>
    %28 = vector.extract_strided_slice %4 {offsets = [16, 0], sizes = [8, 128], strides = [1, 1]} : vector<32x128xf32> to vector<8x128xf32>
    %29 = vector.extract_strided_slice %7 {offsets = [16, 0], sizes = [8, 128], strides = [1, 1]} : vector<32x128xf32> to vector<8x128xf32>
    %30 = vector.shape_cast %28 : vector<8x128xf32> to vector<8x1x128xf32>
    %31 = vector.shape_cast %29 : vector<8x128xf32> to vector<1x8x128xf32>
    %32 = vector.broadcast %30 : vector<8x1x128xf32> to vector<8x8x128xf32>
    %33 = vector.broadcast %31 : vector<1x8x128xf32> to vector<8x8x128xf32>
    %34 = arith.mulf %32, %33 : vector<8x8x128xf32>
    %35 = arith.addf %27, %34 : vector<8x8x128xf32>
    %36 = vector.extract_strided_slice %4 {offsets = [24, 0], sizes = [8, 128], strides = [1, 1]} : vector<32x128xf32> to vector<8x128xf32>
    %37 = vector.extract_strided_slice %7 {offsets = [24, 0], sizes = [8, 128], strides = [1, 1]} : vector<32x128xf32> to vector<8x128xf32>
    %38 = vector.shape_cast %36 : vector<8x128xf32> to vector<8x1x128xf32>
    %39 = vector.shape_cast %37 : vector<8x128xf32> to vector<1x8x128xf32>
    %40 = vector.broadcast %38 : vector<8x1x128xf32> to vector<8x8x128xf32>
    %41 = vector.broadcast %39 : vector<1x8x128xf32> to vector<8x8x128xf32>
    %42 = arith.mulf %40, %41 : vector<8x8x128xf32>
    %43 = arith.addf %35, %42 : vector<8x8x128xf32>
    %cst_15 = arith.constant dense<0xFF800000> : vector<8x128xf32>
    %44 = vector.multi_reduction <maximumf>, %43, %cst_15 [1] : vector<8x8x128xf32> to vector<8x128xf32>
    %45 = vector.shape_cast %44 : vector<8x128xf32> to vector<8x1x128xf32>
    %46 = vector.broadcast %45 : vector<8x1x128xf32> to vector<8x8x128xf32>
    %47 = arith.subf %43, %46 : vector<8x8x128xf32>
    %48 = math.exp %47 : vector<8x8x128xf32>
    %cst_16 = arith.constant dense<0.000000e+00> : vector<8x128xf32>
    %49 = vector.multi_reduction <add>, %48, %cst_16 [1] : vector<8x8x128xf32> to vector<8x128xf32>
    %50 = vector.shape_cast %49 : vector<8x128xf32> to vector<8x1x128xf32>
    %cst_17 = arith.constant 1.000000e+00 : f32
    %51 = vector.broadcast %cst_17 : f32 to vector<8x1x128xf32>
    %52 = arith.divf %51, %50 : vector<8x1x128xf32>
    %53 = vector.broadcast %52 : vector<8x1x128xf32> to vector<8x8x128xf32>
    %54 = arith.mulf %48, %53 : vector<8x8x128xf32>
    %55 = vector.shape_cast %54 : vector<8x8x128xf32> to vector<64x128xf32>
    %c0_18 = arith.constant 0 : index
    %c0_19 = arith.constant 0 : index
    %56 = vector.load %arg11[%c0_18, %c0_19] : memref<64x128xf32, #tpu.memory_space<vmem>>, vector<64x128xf32>
    tpu.vector_store %arg11[%c0_18, %c0_19], %55 {strides = array<i32>} : memref<64x128xf32, #tpu.memory_space<vmem>>, vector<64x128xf32>,
    %57 = vector.extract_strided_slice %10 {offsets = [0, 0], sizes = [8, 128], strides = [1, 1]} : vector<32x128xf32> to vector<8x128xf32>
    %58 = vector.shape_cast %57 : vector<8x128xf32> to vector<1x8x128xf32>
    %59 = vector.broadcast %58 : vector<1x8x128xf32> to vector<8x8x128xf32>
    %60 = arith.mulf %54, %59 : vector<8x8x128xf32>
    %cst_20 = arith.constant dense<0.000000e+00> : vector<8x128xf32>
    %61 = vector.multi_reduction <add>, %60, %cst_20 [1] : vector<8x8x128xf32> to vector<8x128xf32>
    %62 = vector.extract_strided_slice %10 {offsets = [8, 0], sizes = [8, 128], strides = [1, 1]} : vector<32x128xf32> to vector<8x128xf32>
    %63 = vector.shape_cast %62 : vector<8x128xf32> to vector<1x8x128xf32>
    %64 = vector.broadcast %63 : vector<1x8x128xf32> to vector<8x8x128xf32>
    %65 = arith.mulf %54, %64 : vector<8x8x128xf32>
    %cst_21 = arith.constant dense<0.000000e+00> : vector<8x128xf32>
    %66 = vector.multi_reduction <add>, %65, %cst_21 [1] : vector<8x8x128xf32> to vector<8x128xf32>
    %67 = vector.extract_strided_slice %10 {offsets = [16, 0], sizes = [8, 128], strides = [1, 1]} : vector<32x128xf32> to vector<8x128xf32>
    %68 = vector.shape_cast %67 : vector<8x128xf32> to vector<1x8x128xf32>
    %69 = vector.broadcast %68 : vector<1x8x128xf32> to vector<8x8x128xf32>
    %70 = arith.mulf %54, %69 : vector<8x8x128xf32>
    %cst_22 = arith.constant dense<0.000000e+00> : vector<8x128xf32>
    %71 = vector.multi_reduction <add>, %70, %cst_22 [1] : vector<8x8x128xf32> to vector<8x128xf32>
    %72 = vector.extract_strided_slice %10 {offsets = [24, 0], sizes = [8, 128], strides = [1, 1]} : vector<32x128xf32> to vector<8x128xf32>
    %73 = vector.shape_cast %72 : vector<8x128xf32> to vector<1x8x128xf32>
    %74 = vector.broadcast %73 : vector<1x8x128xf32> to vector<8x8x128xf32>
    %75 = arith.mulf %54, %74 : vector<8x8x128xf32>
    %cst_23 = arith.constant dense<0.000000e+00> : vector<8x128xf32>
    %76 = vector.multi_reduction <add>, %75, %cst_23 [1] : vector<8x8x128xf32> to vector<8x128xf32>
    %77 = tpu.concatenate %61, %66, %71, %76 in 0 : vector<8x128xf32>, vector<8x128xf32>, vector<8x128xf32>, vector<8x128xf32> -> vector<32x128xf32>
    %c0_24 = arith.constant 0 : index
    %c0_25 = arith.constant 0 : index
    %78 = vector.load %arg7[%c0_24, %c0_25] : memref<32x32xbf16, #tpu.memory_space<vmem>>, vector<32x32xbf16>
    %79 = arith.extf %78 : vector<32x32xbf16> to vector<32x32xf32>
    %cst_26 = arith.constant dense<0.000000e+00> : vector<32x128xf32>
    %80 = tpu.matmul %79, %77, %cst_26 {dimension_numbers = #tpu.dot_dimension_numbers<[1], [0], [0], [1], [0, 0, 1, 1], [], []>} : vector<32x32xf32>, vector<32x128xf32>, vector<32x128xf32> -> vector<32x128xf32>
    %81 = arith.extf %0 : vector<32x128xbf16> to vector<32x128xf32>
    %82 = arith.addf %80, %81 : vector<32x128xf32>
    %cst_27 = arith.constant dense<0.000000e+00> : vector<128xf32>
    %83 = vector.multi_reduction <add>, %82, %cst_27 [0] : vector<32x128xf32> to vector<128xf32>
    %84 = vector.shape_cast %83 : vector<128xf32> to vector<1x128xf32>
    %cst_28 = arith.constant 3.125000e-02 : f32
    %85 = vector.broadcast %cst_28 : f32 to vector<1x128xf32>
    %86 = arith.mulf %84, %85 : vector<1x128xf32>
    %87 = vector.broadcast %86 : vector<1x128xf32> to vector<32x128xf32>
    %88 = arith.subf %82, %87 : vector<32x128xf32>
    %89 = arith.mulf %88, %88 : vector<32x128xf32>
    %cst_29 = arith.constant dense<0.000000e+00> : vector<128xf32>
    %90 = vector.multi_reduction <add>, %89, %cst_29 [0] : vector<32x128xf32> to vector<128xf32>
    %91 = vector.shape_cast %90 : vector<128xf32> to vector<1x128xf32>
    %cst_30 = arith.constant 3.125000e-02 : f32
    %92 = vector.broadcast %cst_30 : f32 to vector<1x128xf32>
    %93 = arith.mulf %91, %92 : vector<1x128xf32>
    %cst_31 = arith.constant 9.99999997E-7 : f32
    %94 = vector.broadcast %cst_31 : f32 to vector<1x128xf32>
    %95 = arith.addf %93, %94 : vector<1x128xf32>
    %96 = math.rsqrt %95 : vector<1x128xf32>
    %97 = vector.broadcast %96 : vector<1x128xf32> to vector<32x128xf32>
    %98 = arith.mulf %88, %97 : vector<32x128xf32>
    %c0_32 = arith.constant 0 : index
    %c0_33 = arith.constant 0 : index
    %99 = vector.load %arg8[%c0_32, %c0_33] : memref<32x1xf32, #tpu.memory_space<vmem>>, vector<32x1xf32>
    %100 = vector.broadcast %99 : vector<32x1xf32> to vector<32x128xf32>
    %101 = arith.mulf %98, %100 : vector<32x128xf32>
    %c0_34 = arith.constant 0 : index
    %c0_35 = arith.constant 0 : index
    %102 = vector.load %arg9[%c0_34, %c0_35] : memref<32x1xf32, #tpu.memory_space<vmem>>, vector<32x1xf32>
    %103 = vector.broadcast %102 : vector<32x1xf32> to vector<32x128xf32>
    %104 = arith.addf %101, %103 : vector<32x128xf32>
    %c0_36 = arith.constant 0 : index
    %c0_37 = arith.constant 0 : index
    %105 = vector.load %arg10[%c0_36, %c0_37] : memref<32x128xf32, #tpu.memory_space<vmem>>, vector<32x128xf32>
    tpu.vector_store %arg10[%c0_36, %c0_37], %104 {strides = array<i32>} : memref<32x128xf32, #tpu.memory_space<vmem>>, vector<32x128xf32>,
    return
  }
  func.func @transform_0(%arg0: i32) -> (i32, i32) {
    %c0_i32 = arith.constant 0 : i32
    %c0_i32_0 = arith.constant 0 : i32
    return %c0_i32, %arg0 : i32, i32
  }
  func.func @transform_1(%arg0: i32) -> (i32, i32) {
    %c0_i32 = arith.constant 0 : i32
    %c0_i32_0 = arith.constant 0 : i32
    return %c0_i32, %arg0 : i32, i32
  }
  func.func @transform_2(%arg0: i32) -> (i32, i32) {
    %c0_i32 = arith.constant 0 : i32
    %c0_i32_0 = arith.constant 0 : i32
    return %c0_i32, %arg0 : i32, i32
  }
  func.func @transform_3(%arg0: i32) -> (i32, i32) {
    %c0_i32 = arith.constant 0 : i32
    %c0_i32_0 = arith.constant 0 : i32
    %c0_i32_1 = arith.constant 0 : i32
    return %c0_i32, %c0_i32_0 : i32, i32
  }
  func.func @transform_4(%arg0: i32) -> (i32, i32) {
    %c0_i32 = arith.constant 0 : i32
    %c0_i32_0 = arith.constant 0 : i32
    %c0_i32_1 = arith.constant 0 : i32
    return %c0_i32, %c0_i32_0 : i32, i32
  }
  func.func @transform_5(%arg0: i32) -> (i32, i32) {
    %c0_i32 = arith.constant 0 : i32
    %c0_i32_0 = arith.constant 0 : i32
    %c0_i32_1 = arith.constant 0 : i32
    return %c0_i32, %c0_i32_0 : i32, i32
  }
  func.func @transform_6(%arg0: i32) -> (i32, i32) {
    %c0_i32 = arith.constant 0 : i32
    %c0_i32_0 = arith.constant 0 : i32
    %c0_i32_1 = arith.constant 0 : i32
    return %c0_i32, %c0_i32_0 : i32, i32
  }
  func.func @transform_7(%arg0: i32) -> (i32, i32) {
    %c0_i32 = arith.constant 0 : i32
    %c0_i32_0 = arith.constant 0 : i32
    %c0_i32_1 = arith.constant 0 : i32
    return %c0_i32, %c0_i32_0 : i32, i32
  }
  func.func @transform_8(%arg0: i32) -> (i32, i32) {
    %c0_i32 = arith.constant 0 : i32
    %c0_i32_0 = arith.constant 0 : i32
    %c0_i32_1 = arith.constant 0 : i32
    return %c0_i32, %c0_i32_0 : i32, i32
  }
  func.func @transform_9(%arg0: i32) -> (i32, i32) {
    %c0_i32 = arith.constant 0 : i32
    %c0_i32_0 = arith.constant 0 : i32
    return %c0_i32, %arg0 : i32, i32
  }
  func.func @transform_10(%arg0: i32) -> (i32, i32) {
    %c0_i32 = arith.constant 0 : i32
    %c0_i32_0 = arith.constant 0 : i32
    return %c0_i32, %arg0 : i32, i32
  }
}

</mosaic_0001>

<llo_original>
// kernel: tpu_custom_call.1
$region0: #{tpu_custom_call.1}
  #allocation0 [shape = 'u32[]', space=smem, size = 0x4, offset = 0x4, fixed_abs, tag = 'smem constant byte address 0x4 - core index']
  #allocation1 [shape = 'u32[72,128]{1,0:T(1,128)}', space=vmem, size = 0x9000, scoped, tag = 'internal scratch']
  %s0 = inlined_call_operand.vmem [shape: bf16[32,256], index: 0, kind: input, shape index: {}]
  %s1 = inlined_call_operand.vmem [shape: bf16[32,256], index: 1, kind: input, shape index: {}]
  %s2 = inlined_call_operand.hbm [shape: bf16[32,256], index: 2, kind: input, shape index: {}]
  %s3 = inlined_call_operand.hbm [shape: bf16[32,32], index: 3, kind: input, shape index: {}]
  %s4 = inlined_call_operand.hbm [shape: bf16[32,32], index: 4, kind: input, shape index: {}]
  %s5 = inlined_call_operand.hbm [shape: bf16[32,32], index: 5, kind: input, shape index: {}]
  %s6 = inlined_call_operand.hbm [shape: bf16[32,32], index: 6, kind: input, shape index: {}]
  %s7 = inlined_call_operand.vmem [shape: f32[32,1], index: 7, kind: input, shape index: {}]
  %s8 = inlined_call_operand.vmem [shape: f32[32,1], index: 8, kind: input, shape index: {}]
  %s9 = inlined_call_operand.hbm [shape: f32[32,256], index: 9, kind: output, shape index: {0}]
  %s10 = inlined_call_operand.hbm [shape: f32[64,256], index: 10, kind: output, shape index: {1}]
  %11 = xla_tuple %s9, %s10
  %s12 = sld [smem:[#allocation0]]
  $region179: #{tpu_custom_call.1} parent=0
    _
  %s14 = ssub.s32 1, %s12
  %s15 = scalar_select 0, %s14, %s12
  $region1: #{tpu_custom_call.1} parent=0
    #allocation2 [shape = 'u8[16384]{0}', space=vmem, size = 0x4000, scoped, tag = 'input window, operand 0']
    #allocation3 [shape = 'u8[16384]{0}', space=vmem, size = 0x4000, scoped, tag = 'input window, operand 1']
    #allocation4 [shape = 'u8[16384]{0}', space=vmem, size = 0x4000, scoped, tag = 'input window, operand 2']
    #allocation5 [shape = 's32[2]{0}', space=sflag, size = 0x8, scoped, tag = 'scoped memory for tpu_custom_call.1']
    #allocation6 [shape = 's32[2]{0}', space=sflag, size = 0x8, scoped, tag = 'scoped memory for tpu_custom_call.1']
    #allocation7 [shape = 'u8[8192]{0}', space=vmem, size = 0x2000, scoped, tag = 'input window, operand 3, single buffered']
    #allocation8 [shape = 's32[1]{0}', space=sflag, size = 0x4, scoped, tag = 'scoped memory for tpu_custom_call.1']
    #allocation9 [shape = 'u8[8192]{0}', space=vmem, size = 0x2000, scoped, tag = 'input window, operand 4, single buffered']
    #allocation10 [shape = 'u8[8192]{0}', space=vmem, size = 0x2000, scoped, tag = 'input window, operand 5, single buffered']
    #allocation11 [shape = 's32[1]{0}', space=sflag, size = 0x4, scoped, tag = 'scoped memory for tpu_custom_call.1']
    #allocation12 [shape = 'u8[8192]{0}', space=vmem, size = 0x2000, scoped, tag = 'input window, operand 6, single buffered']
    #allocation13 [shape = 'u8[32768]{0}', space=vmem, size = 0x8000, scoped, tag = 'output window, operand 0']
    #allocation14 [shape = 'u8[65536]{0}', space=vmem, size = 0x10000, scoped, tag = 'output window, operand 1']
    #allocation15 [shape = 's32[2]{0}', space=sflag, size = 0x8, scoped, tag = 'scoped memory for tpu_custom_call.1']
    %16 = vsyncpa [#allocation5], 0
    %s17 = scalar_lea.sflag [#allocation5], 1
    %18 = vsyncpa %s17, 0
    %19 = vsyncpa [#allocation8], 0
    %20 = vsyncpa [#allocation11], 0
    %21 = vsyncpa [#allocation6], 0
    %s22 = scalar_lea.sflag [#allocation6], 1
    %23 = vsyncpa %s22, 0
    %24 = vsyncpa [#allocation15], 0
    %s25 = scalar_lea.sflag [#allocation15], 1
    %26 = vsyncpa %s25, 0
    loop: start=0, step=1, limit=4
    $region2: #{tpu_custom_call.1} parent=1 // loop_pre_header
      _
    $region3: #{tpu_custom_call.1} parent=1 // loop_header
      %s28 = sphi 0, %s32
      %p29 = scmp.ge.s32.totalorder %s28, 4
      %s38 = sphi 0, %s40
      %s41 = sphi 0, %s38
      %s42 = sphi 0, %s41
      %s58 = sphi 0, %s42
      %s64 = sphi 0, %s66
      %s67 = sphi 0, %s64
      %s68 = sphi 0, %s67
      %s84 = sphi 0, %s68
      %s90 = sphi 0, %s92
      %s93 = sphi 0, %s90
      %s94 = sphi 0, %s93
      %s110 = sphi 0, %s94
      %s114 = sphi 0, %s114
      %s116 = sphi 0, %s114
      %s117 = sphi 0, %s116
      %s131 = sphi 0, %s117
      %s135 = sphi 0, %s135
      %s137 = sphi 0, %s135
      %s138 = sphi 0, %s137
      %s152 = sphi 0, %s138
      %s156 = sphi 0, %s156
      %s158 = sphi 0, %s156
      %s159 = sphi 0, %s158
      %s173 = sphi 0, %s159
      %s177 = sphi 0, %s177
      %s179 = sphi 0, %s177
      %s180 = sphi 0, %s179
      %s194 = sphi 0, %s180
      %s198 = sphi 0, %s198
      %s200 = sphi 0, %s198
      %s201 = sphi 0, %s200
      %s215 = sphi 0, %s201
      %s219 = sphi 0, %s219
      %s221 = sphi 0, %s219
      %s222 = sphi 0, %s221
      %s236 = sphi 0, %s222
      %s242 = sphi 0, %s244
      %s245 = sphi 0, %s242
      %s246 = sphi 0, %s245
      %s262 = sphi 0, %s246
      %s268 = sphi 0, %s270
      %s271 = sphi 0, %s268
      %s272 = sphi 0, %s271
      %s288 = sphi 0, %s272
    $region4: #{tpu_custom_call.1} parent=1 // loop_header_branch
      %31 = sbr.rel (%p29) target = $region8
    $region5: #{tpu_custom_call.1} parent=1 // loop_body
      %s33 = ssub.s32 %s28, 1
      %s34 = ssub.s32 %s28, 2
      %s35 = sadd.s32 %s28, 1
      %s36 = ssub.s32 %s28, %s35
      %p37 = scmp.eq.s32.totalorder %s36, 0
      %s39 = sadd.s32 %s38, 1
      %s40 = scalar_select %p37, %s38, %s39
      %p43 = pneg %p37
      %p44 = scmp.eq.s32.totalorder %s28, 1
      %p45 = por %p43, %p44
      %p46 = scmp.ne.s32.totalorder %s38, %s41
      %p47 = scmp.eq.s32.totalorder %s28, 0
      %p48 = por %p46, %p47
      %p49 = scmp.ne.s32.totalorder %s38, %s41
      %p50 = scmp.eq.s32.totalorder %s33, 1
      %p51 = por %p49, %p50
      %p52 = scmp.ne.s32.totalorder %s41, %s42
      %p53 = scmp.eq.s32.totalorder %s33, 0
      %p54 = por %p52, %p53
      %p55 = scmp.ne.s32.totalorder %s41, %s42
      %p56 = scmp.eq.s32.totalorder %s34, 1
      %p57 = por %p55, %p56
      %p59 = scmp.ne.s32.totalorder %s42, %s58
      %p60 = scmp.eq.s32.totalorder %s34, 0
      %p61 = por %p59, %p60
      %s62 = ssub.s32 %s28, %s35
      %p63 = scmp.eq.s32.totalorder %s62, 0
      %s65 = sadd.s32 %s64, 1
      %s66 = scalar_select %p63, %s64, %s65
      %p69 = pneg %p63
      %p70 = scmp.eq.s32.totalorder %s28, 1
      %p71 = por %p69, %p70
      %p72 = scmp.ne.s32.totalorder %s64, %s67
      %p73 = scmp.eq.s32.totalorder %s28, 0
      %p74 = por %p72, %p73
      %p75 = scmp.ne.s32.totalorder %s64, %s67
      %p76 = scmp.eq.s32.totalorder %s33, 1
      %p77 = por %p75, %p76
      %p78 = scmp.ne.s32.totalorder %s67, %s68
      %p79 = scmp.eq.s32.totalorder %s33, 0
      %p80 = por %p78, %p79
      %p81 = scmp.ne.s32.totalorder %s67, %s68
      %p82 = scmp.eq.s32.totalorder %s34, 1
      %p83 = por %p81, %p82
      %p85 = scmp.ne.s32.totalorder %s68, %s84
      %p86 = scmp.eq.s32.totalorder %s34, 0
      %p87 = por %p85, %p86
      %s88 = ssub.s32 %s28, %s35
      %p89 = scmp.eq.s32.totalorder %s88, 0
      %s91 = sadd.s32 %s90, 1
      %s92 = scalar_select %p89, %s90, %s91
      %p95 = pneg %p89
      %p96 = scmp.eq.s32.totalorder %s28, 1
      %p97 = por %p95, %p96
      %p98 = scmp.ne.s32.totalorder %s90, %s93
      %p99 = scmp.eq.s32.totalorder %s28, 0
      %p100 = por %p98, %p99
      %p101 = scmp.ne.s32.totalorder %s90, %s93
      %p102 = scmp.eq.s32.totalorder %s33, 1
      %p103 = por %p101, %p102
      %p104 = scmp.ne.s32.totalorder %s93, %s94
      %p105 = scmp.eq.s32.totalorder %s33, 0
      %p106 = por %p104, %p105
      %p107 = scmp.ne.s32.totalorder %s93, %s94
      %p108 = scmp.eq.s32.totalorder %s34, 1
      %p109 = por %p107, %p108
      %p111 = scmp.ne.s32.totalorder %s94, %s110
      %p112 = scmp.eq.s32.totalorder %s34, 0
      %p113 = por %p111, %p112
      %s115 = sadd.s32 %s114, 1
      %p118 = scmp.eq.s32.totalorder %s28, 1
      %p119 = scmp.ne.s32.totalorder %s114, %s116
      %p120 = scmp.eq.s32.totalorder %s28, 0
      %p121 = por %p119, %p120
      %p122 = scmp.ne.s32.totalorder %s114, %s116
      %p123 = scmp.eq.s32.totalorder %s33, 1
      %p124 = por %p122, %p123
      %p125 = scmp.ne.s32.totalorder %s116, %s117
      %p126 = scmp.eq.s32.totalorder %s33, 0
      %p127 = por %p125, %p126
      %p128 = scmp.ne.s32.totalorder %s116, %s117
      %p129 = scmp.eq.s32.totalorder %s34, 1
      %p130 = por %p128, %p129
      %p132 = scmp.ne.s32.totalorder %s117, %s131
      %p133 = scmp.eq.s32.totalorder %s34, 0
      %p134 = por %p132, %p133
      %s136 = sadd.s32 %s135, 1
      %p139 = scmp.eq.s32.totalorder %s28, 1
      %p140 = scmp.ne.s32.totalorder %s135, %s137
      %p141 = scmp.eq.s32.totalorder %s28, 0
      %p142 = por %p140, %p141
      %p143 = scmp.ne.s32.totalorder %s135, %s137
      %p144 = scmp.eq.s32.totalorder %s33, 1
      %p145 = por %p143, %p144
      %p146 = scmp.ne.s32.totalorder %s137, %s138
      %p147 = scmp.eq.s32.totalorder %s33, 0
      %p148 = por %p146, %p147
      %p149 = scmp.ne.s32.totalorder %s137, %s138
      %p150 = scmp.eq.s32.totalorder %s34, 1
      %p151 = por %p149, %p150
      %p153 = scmp.ne.s32.totalorder %s138, %s152
      %p154 = scmp.eq.s32.totalorder %s34, 0
      %p155 = por %p153, %p154
      %s157 = sadd.s32 %s156, 1
      %p160 = scmp.eq.s32.totalorder %s28, 1
      %p161 = scmp.ne.s32.totalorder %s156, %s158
      %p162 = scmp.eq.s32.totalorder %s28, 0
      %p163 = por %p161, %p162
      %p164 = scmp.ne.s32.totalorder %s156, %s158
      %p165 = scmp.eq.s32.totalorder %s33, 1
      %p166 = por %p164, %p165
      %p167 = scmp.ne.s32.totalorder %s158, %s159
      %p168 = scmp.eq.s32.totalorder %s33, 0
      %p169 = por %p167, %p168
      %p170 = scmp.ne.s32.totalorder %s158, %s159
      %p171 = scmp.eq.s32.totalorder %s34, 1
      %p172 = por %p170, %p171
      %p174 = scmp.ne.s32.totalorder %s159, %s173
      %p175 = scmp.eq.s32.totalorder %s34, 0
      %p176 = por %p174, %p175
      %s178 = sadd.s32 %s177, 1
      %p181 = scmp.eq.s32.totalorder %s28, 1
      %p182 = scmp.ne.s32.totalorder %s177, %s179
      %p183 = scmp.eq.s32.totalorder %s28, 0
      %p184 = por %p182, %p183
      %p185 = scmp.ne.s32.totalorder %s177, %s179
      %p186 = scmp.eq.s32.totalorder %s33, 1
      %p187 = por %p185, %p186
      %p188 = scmp.ne.s32.totalorder %s179, %s180
      %p189 = scmp.eq.s32.totalorder %s33, 0
      %p190 = por %p188, %p189
      %p191 = scmp.ne.s32.totalorder %s179, %s180
      %p192 = scmp.eq.s32.totalorder %s34, 1
      %p193 = por %p191, %p192
      %p195 = scmp.ne.s32.totalorder %s180, %s194
      %p196 = scmp.eq.s32.totalorder %s34, 0
      %p197 = por %p195, %p196
      %s199 = sadd.s32 %s198, 1
      %p202 = scmp.eq.s32.totalorder %s28, 1
      %p203 = scmp.ne.s32.totalorder %s198, %s200
      %p204 = scmp.eq.s32.totalorder %s28, 0
      %p205 = por %p203, %p204
      %p206 = scmp.ne.s32.totalorder %s198, %s200
      %p207 = scmp.eq.s32.totalorder %s33, 1
      %p208 = por %p206, %p207
      %p209 = scmp.ne.s32.totalorder %s200, %s201
      %p210 = scmp.eq.s32.totalorder %s33, 0
      %p211 = por %p209, %p210
      %p212 = scmp.ne.s32.totalorder %s200, %s201
      %p213 = scmp.eq.s32.totalorder %s34, 1
      %p214 = por %p212, %p213
      %p216 = scmp.ne.s32.totalorder %s201, %s215
      %p217 = scmp.eq.s32.totalorder %s34, 0
      %p218 = por %p216, %p217
      %s220 = sadd.s32 %s219, 1
      %p223 = scmp.eq.s32.totalorder %s28, 1
      %p224 = scmp.ne.s32.totalorder %s219, %s221
      %p225 = scmp.eq.s32.totalorder %s28, 0
      %p226 = por %p224, %p225
      %p227 = scmp.ne.s32.totalorder %s219, %s221
      %p228 = scmp.eq.s32.totalorder %s33, 1
      %p229 = por %p227, %p228
      %p230 = scmp.ne.s32.totalorder %s221, %s222
      %p231 = scmp.eq.s32.totalorder %s33, 0
      %p232 = por %p230, %p231
      %p233 = scmp.ne.s32.totalorder %s221, %s222
      %p234 = scmp.eq.s32.totalorder %s34, 1
      %p235 = por %p233, %p234
      %p237 = scmp.ne.s32.totalorder %s222, %s236
      %p238 = scmp.eq.s32.totalorder %s34, 0
      %p239 = por %p237, %p238
      %s240 = ssub.s32 %s28, %s35
      %p241 = scmp.eq.s32.totalorder %s240, 0
      %s243 = sadd.s32 %s242, 1
      %s244 = scalar_select %p241, %s242, %s243
      %p247 = pneg %p241
      %p248 = scmp.eq.s32.totalorder %s28, 1
      %p249 = por %p247, %p248
      %p250 = scmp.ne.s32.totalorder %s242, %s245
      %p251 = scmp.eq.s32.totalorder %s28, 0
      %p252 = por %p250, %p251
      %p253 = scmp.ne.s32.totalorder %s242, %s245
      %p254 = scmp.eq.s32.totalorder %s33, 1
      %p255 = por %p253, %p254
      %p256 = scmp.ne.s32.totalorder %s245, %s246
      %p257 = scmp.eq.s32.totalorder %s33, 0
      %p258 = por %p256, %p257
      %p259 = scmp.ne.s32.totalorder %s245, %s246
      %p260 = scmp.eq.s32.totalorder %s34, 1
      %p261 = por %p259, %p260
      %p263 = scmp.ne.s32.totalorder %s246, %s262
      %p264 = scmp.eq.s32.totalorder %s34, 0
      %p265 = por %p263, %p264
      %s266 = ssub.s32 %s28, %s35
      %p267 = scmp.eq.s32.totalorder %s266, 0
      %s269 = sadd.s32 %s268, 1
      %s270 = scalar_select %p267, %s268, %s269
      %p273 = pneg %p267
      %p274 = scmp.eq.s32.totalorder %s28, 1
      %p275 = por %p273, %p274
      %p276 = scmp.ne.s32.totalorder %s268, %s271
      %p277 = scmp.eq.s32.totalorder %s28, 0
      %p278 = por %p276, %p277
      %p279 = scmp.ne.s32.totalorder %s268, %s271
      %p280 = scmp.eq.s32.totalorder %s33, 1
      %p281 = por %p279, %p280
      %p282 = scmp.ne.s32.totalorder %s271, %s272
      %p283 = scmp.eq.s32.totalorder %s33, 0
      %p284 = por %p282, %p283
      %p285 = scmp.ne.s32.totalorder %s271, %s272
      %p286 = scmp.eq.s32.totalorder %s34, 1
      %p287 = por %p285, %p286
      %p289 = scmp.ne.s32.totalorder %s272, %s288
      %p290 = scmp.eq.s32.totalorder %s34, 0
      %p291 = por %p289, %p290
      %p292 = scmp.le.s32.totalorder 1, %s28
      %p293 = scmp.lt.s32.totalorder %s28, 3
      %p294 = pnand %p292, %p293
      %p295 = pneg %p294
      // Predicated region
      $region9: #{tpu_custom_call.1} parent=5 // pred_check
        _
      $region10: #{tpu_custom_call.1} parent=5 // pred_check_branch
        %297 = sbr.rel (%p294) target = $region12
      $region11: #{tpu_custom_call.1} parent=5 // pred_region
        %s298 = ssub.s32 %s28, 1
        // Predicated region
        $region13: #{tpu_custom_call.1} parent=11 // pred_check
          %p299 = pneg %p127
        $region14: #{tpu_custom_call.1} parent=11 // pred_check_branch
          %301 = sbr.rel (%p299) target = $region16
        $region15: #{tpu_custom_call.1} parent=11 // pred_region
          %303 = vsyncadd [#allocation8], 0
          %s304 = sshll.u32 %s3, 4
          %s305 = int_to_ptr.hbm [resolvable:$true] %s304
          %s306 = sshll.u32 [#allocation7], 4
          %s307 = int_to_ptr.vmem [resolvable:$true] %s306
          %312 = dma.hbm_to_vmem [thread:$0]  %s305, 256, %s307, [#allocation8], 64, 64, 4
        $region16: #{tpu_custom_call.1} parent=11 // pred_fallthru
          _
        // Predicated region
        $region17: #{tpu_custom_call.1} parent=11 // pred_check
          %p313 = pneg %p148
        $region18: #{tpu_custom_call.1} parent=11 // pred_check_branch
          %315 = sbr.rel (%p313) target = $region20
        $region19: #{tpu_custom_call.1} parent=11 // pred_region
          %317 = vsyncadd [#allocation8], 0
          %s318 = sshll.u32 %s4, 4
          %s319 = int_to_ptr.hbm [resolvable:$true] %s318
          %s320 = sshll.u32 [#allocation9], 4
          %s321 = int_to_ptr.vmem [resolvable:$true] %s320
          %326 = dma.hbm_to_vmem [thread:$0]  %s319, 256, %s321, [#allocation8], 64, 64, 4
        $region20: #{tpu_custom_call.1} parent=11 // pred_fallthru
          _
        // Predicated region
        $region21: #{tpu_custom_call.1} parent=11 // pred_check
          %p327 = pneg %p169
        $region22: #{tpu_custom_call.1} parent=11 // pred_check_branch
          %329 = sbr.rel (%p327) target = $region24
        $region23: #{tpu_custom_call.1} parent=11 // pred_region
          %331 = vsyncadd [#allocation11], 0
          %s332 = sshll.u32 %s5, 4
          %s333 = int_to_ptr.hbm [resolvable:$true] %s332
          %s334 = sshll.u32 [#allocation10], 4
          %s335 = int_to_ptr.vmem [resolvable:$true] %s334
          %340 = dma.hbm_to_vmem [thread:$0]  %s333, 256, %s335, [#allocation11], 64, 64, 4
        $region24: #{tpu_custom_call.1} parent=11 // pred_fallthru
          _
        // Predicated region
        $region25: #{tpu_custom_call.1} parent=11 // pred_check
          %p341 = pneg %p190
        $region26: #{tpu_custom_call.1} parent=11 // pred_check_branch
          %343 = sbr.rel (%p341) target = $region28
        $region27: #{tpu_custom_call.1} parent=11 // pred_region
          %345 = vsyncadd [#allocation11], 0
          %s346 = sshll.u32 %s6, 4
          %s347 = int_to_ptr.hbm [resolvable:$true] %s346
          %s348 = sshll.u32 [#allocation12], 4
          %s349 = int_to_ptr.vmem [resolvable:$true] %s348
          %354 = dma.hbm_to_vmem [thread:$0]  %s347, 256, %s349, [#allocation11], 64, 64, 4
        $region28: #{tpu_custom_call.1} parent=11 // pred_fallthru
          _
        // Predicated region
        $region29: #{tpu_custom_call.1} parent=11 // pred_check
          %p355 = pneg %p211
        $region30: #{tpu_custom_call.1} parent=11 // pred_check_branch
          %357 = sbr.rel (%p355) target = $region32
        $region31: #{tpu_custom_call.1} parent=11 // pred_region
          _
        $region32: #{tpu_custom_call.1} parent=11 // pred_fallthru
          _
        // Predicated region
        $region33: #{tpu_custom_call.1} parent=11 // pred_check
          %p358 = pneg %p232
        $region34: #{tpu_custom_call.1} parent=11 // pred_check_branch
          %360 = sbr.rel (%p358) target = $region36
        $region35: #{tpu_custom_call.1} parent=11 // pred_region
          _
        $region36: #{tpu_custom_call.1} parent=11 // pred_fallthru
          _
      $region12: #{tpu_custom_call.1} parent=5 // pred_fallthru
        _
      %p361 = scmp.lt.s32.totalorder %s28, 2
      // Predicated region
      $region37: #{tpu_custom_call.1} parent=5 // pred_check
        %p362 = pneg %p361
      $region38: #{tpu_custom_call.1} parent=5 // pred_check_branch
        %364 = sbr.rel (%p362) target = $region40
      $region39: #{tpu_custom_call.1} parent=5 // pred_region
        // Predicated region
        $region41: #{tpu_custom_call.1} parent=39 // pred_check
          %p365 = pneg %p48
        $region42: #{tpu_custom_call.1} parent=39 // pred_check_branch
          %367 = sbr.rel (%p365) target = $region44
        $region43: #{tpu_custom_call.1} parent=39 // pred_region
          %s368 = sand.u32 %s38, 1
          %s369 = sand.u32 %s38, 1
          %s370 = smul.addr %s369, 16
          %s371 = scalar_lea.vmem [#allocation2], %s370
          %s372 = smul.addr %s28, 4
          %s373 = scalar_lea.vmem %s0, %s372
          // Predicated region
          $region45: #{tpu_custom_call.1} parent=43 // pred_check
            _
          $region46: #{tpu_custom_call.1} parent=43 // pred_check_branch
            %375 = sbr.rel (0) target = $region48
          $region47: #{tpu_custom_call.1} parent=43 // pred_region
            // Predicated region
            $region49: #{tpu_custom_call.1} parent=47 // pred_check
              _
            $region50: #{tpu_custom_call.1} parent=47 // pred_check_branch
              %377 = sbr.rel target = $region52
            $region51: #{tpu_custom_call.1} parent=47 // pred_region
              // Predicated region
              $region64: #{tpu_custom_call.1} parent=51 // pred_check
                _
              $region65: #{tpu_custom_call.1} parent=51 // pred_check_branch
                %399 = sbr.rel (0) target = $region67
              $region66: #{tpu_custom_call.1} parent=51 // pred_region
                loop: start=0, step=1, limit=1
                $region68: #{tpu_custom_call.1} parent=66 // loop_pre_header
                  _
                $region69: #{tpu_custom_call.1} parent=66 // loop_header
                  %s401 = sphi 0, %s405
                  %p402 = scmp.ge.s32.totalorder %s401, 1
                  %s406 = sphi %s373, %s373
                  %s407 = sphi %s371, %s371
                $region70: #{tpu_custom_call.1} parent=66 // loop_header_branch
                  %404 = sbr.rel (%p402) target = $region74
                $region71: #{tpu_custom_call.1} parent=66 // loop_body
                  _
                $region72: #{tpu_custom_call.1} parent=66 // loop_footer
                  %s405 = sadd.s32 1, %s401
                $region73: #{tpu_custom_call.1} parent=66 // loop_footer_branch
                  %400 = sbr.rel target = $region69
                $region74: #{tpu_custom_call.1} parent=66 // loop_exit
                  _
                %s409 = ssub.s32 16, 1
                loop: start=0, step=1, limit=1
                $region75: #{tpu_custom_call.1} parent=66 // loop_pre_header
                  _
                $region76: #{tpu_custom_call.1} parent=66 // loop_header
                  %s411 = sphi 0, %s415
                  %p412 = scmp.ge.s32.totalorder %s411, 1
                  %s416 = sphi %s373, %s373
                  %s417 = sphi %s371, %s371
                $region77: #{tpu_custom_call.1} parent=66 // loop_header_branch
                  %414 = sbr.rel (%p412) target = $region81
                $region78: #{tpu_custom_call.1} parent=66 // loop_body
                  %v418 = vld [vmem:[%s416] sm:%s409]
                  %419 = vst [vmem:[%s417] sm:%s409] %v418
                  %v420 = vld [vmem:[%s416 + $0x8] sm:%s409]
                  %421 = vst [vmem:[%s417 + $0x4] sm:%s409] %v420
                  %v422 = vld [vmem:[%s416 + $0x10] sm:%s409]
                  %423 = vst [vmem:[%s417 + $0x8] sm:%s409] %v422
                  %v424 = vld [vmem:[%s416 + $0x18] sm:%s409]
                  %425 = vst [vmem:[%s417 + $0xc] sm:%s409] %v424
                $region79: #{tpu_custom_call.1} parent=66 // loop_footer
                  %s415 = sadd.s32 1, %s411
                $region80: #{tpu_custom_call.1} parent=66 // loop_footer_branch
                  %410 = sbr.rel target = $region76
                $region81: #{tpu_custom_call.1} parent=66 // loop_exit
                  _
              $region67: #{tpu_custom_call.1} parent=51 // pred_fallthru
                _
            $region52: #{tpu_custom_call.1} parent=47 // pred_fallthru
              _
            // Predicated region
            $region53: #{tpu_custom_call.1} parent=47 // pred_check
              _
            $region54: #{tpu_custom_call.1} parent=47 // pred_check_branch
              %379 = sbr.rel (0) target = $region56
            $region55: #{tpu_custom_call.1} parent=47 // pred_region
              %s381 = ssub.s32 16, 1
              loop: start=0, step=1, limit=1
              $region57: #{tpu_custom_call.1} parent=55 // loop_pre_header
                _
              $region58: #{tpu_custom_call.1} parent=55 // loop_header
                %s383 = sphi 0, %s387
                %p384 = scmp.ge.s32.totalorder %s383, 1
                %s388 = sphi %s373, %s373
                %s389 = sphi %s371, %s371
              $region59: #{tpu_custom_call.1} parent=55 // loop_header_branch
                %386 = sbr.rel (%p384) target = $region63
              $region60: #{tpu_custom_call.1} parent=55 // loop_body
                %v390 = vld [vmem:[%s388] sm:%s381]
                %391 = vst [vmem:[%s389] sm:%s381] %v390
                %v392 = vld [vmem:[%s388 + $0x8] sm:%s381]
                %393 = vst [vmem:[%s389 + $0x4] sm:%s381] %v392
                %v394 = vld [vmem:[%s388 + $0x10] sm:%s381]
                %395 = vst [vmem:[%s389 + $0x8] sm:%s381] %v394
                %v396 = vld [vmem:[%s388 + $0x18] sm:%s381]
                %397 = vst [vmem:[%s389 + $0xc] sm:%s381] %v396
              $region61: #{tpu_custom_call.1} parent=55 // loop_footer
                %s387 = sadd.s32 1, %s383
              $region62: #{tpu_custom_call.1} parent=55 // loop_footer_branch
                %382 = sbr.rel target = $region58
              $region63: #{tpu_custom_call.1} parent=55 // loop_exit
                _
            $region56: #{tpu_custom_call.1} parent=47 // pred_fallthru
              _
          $region48: #{tpu_custom_call.1} parent=43 // pred_fallthru
            _
          %426 = vnop
        $region44: #{tpu_custom_call.1} parent=39 // pred_fallthru
          _
        // Predicated region
        $region82: #{tpu_custom_call.1} parent=39 // pred_check
          %p427 = pneg %p74
        $region83: #{tpu_custom_call.1} parent=39 // pred_check_branch
          %429 = sbr.rel (%p427) target = $region85
        $region84: #{tpu_custom_call.1} parent=39 // pred_region
          %s430 = sand.u32 %s64, 1
          %s431 = sand.u32 %s64, 1
          %s432 = smul.addr %s431, 16
          %s433 = scalar_lea.vmem [#allocation3], %s432
          %s434 = smul.addr %s28, 4
          %s435 = scalar_lea.vmem %s1, %s434
          // Predicated region
          $region86: #{tpu_custom_call.1} parent=84 // pred_check
            _
          $region87: #{tpu_custom_call.1} parent=84 // pred_check_branch
            %437 = sbr.rel (0) target = $region89
          $region88: #{tpu_custom_call.1} parent=84 // pred_region
            // Predicated region
            $region90: #{tpu_custom_call.1} parent=88 // pred_check
              _
            $region91: #{tpu_custom_call.1} parent=88 // pred_check_branch
              %439 = sbr.rel target = $region93
            $region92: #{tpu_custom_call.1} parent=88 // pred_region
              // Predicated region
              $region105: #{tpu_custom_call.1} parent=92 // pred_check
                _
              $region106: #{tpu_custom_call.1} parent=92 // pred_check_branch
                %461 = sbr.rel (0) target = $region108
              $region107: #{tpu_custom_call.1} parent=92 // pred_region
                loop: start=0, step=1, limit=1
                $region109: #{tpu_custom_call.1} parent=107 // loop_pre_header
                  _
                $region110: #{tpu_custom_call.1} parent=107 // loop_header
                  %s463 = sphi 0, %s467
                  %p464 = scmp.ge.s32.totalorder %s463, 1
                  %s468 = sphi %s435, %s435
                  %s469 = sphi %s433, %s433
                $region111: #{tpu_custom_call.1} parent=107 // loop_header_branch
                  %466 = sbr.rel (%p464) target = $region115
                $region112: #{tpu_custom_call.1} parent=107 // loop_body
                  _
                $region113: #{tpu_custom_call.1} parent=107 // loop_footer
                  %s467 = sadd.s32 1, %s463
                $region114: #{tpu_custom_call.1} parent=107 // loop_footer_branch
                  %462 = sbr.rel target = $region110
                $region115: #{tpu_custom_call.1} parent=107 // loop_exit
                  _
                %s471 = ssub.s32 16, 1
                loop: start=0, step=1, limit=1
                $region116: #{tpu_custom_call.1} parent=107 // loop_pre_header
                  _
                $region117: #{tpu_custom_call.1} parent=107 // loop_header
                  %s473 = sphi 0, %s477
                  %p474 = scmp.ge.s32.totalorder %s473, 1
                  %s478 = sphi %s435, %s435
                  %s479 = sphi %s433, %s433
                $region118: #{tpu_custom_call.1} parent=107 // loop_header_branch
                  %476 = sbr.rel (%p474) target = $region122
                $region119: #{tpu_custom_call.1} parent=107 // loop_body
                  %v480 = vld [vmem:[%s478] sm:%s471]
                  %481 = vst [vmem:[%s479] sm:%s471] %v480
                  %v482 = vld [vmem:[%s478 + $0x8] sm:%s471]
                  %483 = vst [vmem:[%s479 + $0x4] sm:%s471] %v482
                  %v484 = vld [vmem:[%s478 + $0x10] sm:%s471]
                  %485 = vst [vmem:[%s479 + $0x8] sm:%s471] %v484
                  %v486 = vld [vmem:[%s478 + $0x18] sm:%s471]
                  %487 = vst [vmem:[%s479 + $0xc] sm:%s471] %v486
                $region120: #{tpu_custom_call.1} parent=107 // loop_footer
                  %s477 = sadd.s32 1, %s473
                $region121: #{tpu_custom_call.1} parent=107 // loop_footer_branch
                  %472 = sbr.rel target = $region117
                $region122: #{tpu_custom_call.1} parent=107 // loop_exit
                  _
              $region108: #{tpu_custom_call.1} parent=92 // pred_fallthru
                _
            $region93: #{tpu_custom_call.1} parent=88 // pred_fallthru
              _
            // Predicated region
            $region94: #{tpu_custom_call.1} parent=88 // pred_check
              _
            $region95: #{tpu_custom_call.1} parent=88 // pred_check_branch
              %441 = sbr.rel (0) target = $region97
            $region96: #{tpu_custom_call.1} parent=88 // pred_region
              %s443 = ssub.s32 16, 1
              loop: start=0, step=1, limit=1
              $region98: #{tpu_custom_call.1} parent=96 // loop_pre_header
                _
              $region99: #{tpu_custom_call.1} parent=96 // loop_header
                %s445 = sphi 0, %s449
                %p446 = scmp.ge.s32.totalorder %s445, 1
                %s450 = sphi %s435, %s435
                %s451 = sphi %s433, %s433
              $region100: #{tpu_custom_call.1} parent=96 // loop_header_branch
                %448 = sbr.rel (%p446) target = $region104
              $region101: #{tpu_custom_call.1} parent=96 // loop_body
                %v452 = vld [vmem:[%s450] sm:%s443]
                %453 = vst [vmem:[%s451] sm:%s443] %v452
                %v454 = vld [vmem:[%s450 + $0x8] sm:%s443]
                %455 = vst [vmem:[%s451 + $0x4] sm:%s443] %v454
                %v456 = vld [vmem:[%s450 + $0x10] sm:%s443]
                %457 = vst [vmem:[%s451 + $0x8] sm:%s443] %v456
                %v458 = vld [vmem:[%s450 + $0x18] sm:%s443]
                %459 = vst [vmem:[%s451 + $0xc] sm:%s443] %v458
              $region102: #{tpu_custom_call.1} parent=96 // loop_footer
                %s449 = sadd.s32 1, %s445
              $region103: #{tpu_custom_call.1} parent=96 // loop_footer_branch
                %444 = sbr.rel target = $region99
              $region104: #{tpu_custom_call.1} parent=96 // loop_exit
                _
            $region97: #{tpu_custom_call.1} parent=88 // pred_fallthru
              _
          $region89: #{tpu_custom_call.1} parent=84 // pred_fallthru
            _
          %488 = vnop
        $region85: #{tpu_custom_call.1} parent=39 // pred_fallthru
          _
        // Predicated region
        $region123: #{tpu_custom_call.1} parent=39 // pred_check
          %p489 = pneg %p100
        $region124: #{tpu_custom_call.1} parent=39 // pred_check_branch
          %491 = sbr.rel (%p489) target = $region126
        $region125: #{tpu_custom_call.1} parent=39 // pred_region
          %s492 = sand.u32 %s90, 1
          %s493 = scalar_lea.sflag [#allocation5], %s492
          %s494 = sand.u32 %s90, 1
          %s495 = smul.addr %s494, 16
          %s496 = scalar_lea.vmem [#allocation4], %s495
          %498 = vsyncadd %s493, 0
          %s499 = smul.addr %s28, 4
          %s500 = scalar_lea.hbm %s2, %s499
          %s501 = sshll.u32 %s500, 4
          %s502 = int_to_ptr.hbm [resolvable:$true] %s501
          %s503 = sshll.u32 %s496, 4
          %s504 = int_to_ptr.vmem [resolvable:$true] %s503
          %509 = dma.hbm_to_vmem [thread:$0]  %s502, 256, %s504, %s493, 128, 64, 4
        $region126: #{tpu_custom_call.1} parent=39 // pred_fallthru
          _
      $region40: #{tpu_custom_call.1} parent=5 // pred_fallthru
        _
      %p510 = scmp.le.s32.totalorder 1, %s28
      %p511 = scmp.lt.s32.totalorder %s28, 3
      %p512 = pnand %p510, %p511
      %p513 = pneg %p512
      // Predicated region
      $region127: #{tpu_custom_call.1} parent=5 // pred_check
        _
      $region128: #{tpu_custom_call.1} parent=5 // pred_check_branch
        %515 = sbr.rel (%p512) target = $region130
      $region129: #{tpu_custom_call.1} parent=5 // pred_region
        %s516 = ssub.s32 %s28, 1
        %s517 = sand.u32 %s41, 1
        %s518 = sand.u32 %s41, 1
        %s519 = smul.addr %s518, 16
        %s520 = scalar_lea.vmem [#allocation2], %s519
        // Predicated region
        $region131: #{tpu_custom_call.1} parent=129 // pred_check
          %p521 = pneg %p54
        $region132: #{tpu_custom_call.1} parent=129 // pred_check_branch
          %523 = sbr.rel (%p521) target = $region134
        $region133: #{tpu_custom_call.1} parent=129 // pred_region
          _
        $region134: #{tpu_custom_call.1} parent=129 // pred_fallthru
          _
        %s524 = sand.u32 %s67, 1
        %s525 = sand.u32 %s67, 1
        %s526 = smul.addr %s525, 16
        %s527 = scalar_lea.vmem [#allocation3], %s526
        // Predicated region
        $region135: #{tpu_custom_call.1} parent=129 // pred_check
          %p528 = pneg %p80
        $region136: #{tpu_custom_call.1} parent=129 // pred_check_branch
          %530 = sbr.rel (%p528) target = $region138
        $region137: #{tpu_custom_call.1} parent=129 // pred_region
          _
        $region138: #{tpu_custom_call.1} parent=129 // pred_fallthru
          _
        %s531 = sand.u32 %s93, 1
        %s532 = scalar_lea.sflag [#allocation5], %s531
        %s533 = sand.u32 %s93, 1
        %s534 = smul.addr %s533, 16
        %s535 = scalar_lea.vmem [#allocation4], %s534
        // Predicated region
        $region139: #{tpu_custom_call.1} parent=129 // pred_check
          %p536 = pneg %p106
        $region140: #{tpu_custom_call.1} parent=129 // pred_check_branch
          %538 = sbr.rel (%p536) target = $region142
        $region141: #{tpu_custom_call.1} parent=129 // pred_region
          %540 = dma.done %s532, 256
        $region142: #{tpu_custom_call.1} parent=129 // pred_fallthru
          _
        // Predicated region
        $region143: #{tpu_custom_call.1} parent=129 // pred_check
          %p541 = pneg %p127
        $region144: #{tpu_custom_call.1} parent=129 // pred_check_branch
          %543 = sbr.rel (%p541) target = $region146
        $region145: #{tpu_custom_call.1} parent=129 // pred_region
          %545 = dma.done [#allocation8], 256
        $region146: #{tpu_custom_call.1} parent=129 // pred_fallthru
          _
        // Predicated region
        $region147: #{tpu_custom_call.1} parent=129 // pred_check
          %p546 = pneg %p148
        $region148: #{tpu_custom_call.1} parent=129 // pred_check_branch
          %548 = sbr.rel (%p546) target = $region150
        $region149: #{tpu_custom_call.1} parent=129 // pred_region
          %550 = dma.done [#allocation8], 256
        $region150: #{tpu_custom_call.1} parent=129 // pred_fallthru
          _
        // Predicated region
        $region151: #{tpu_custom_call.1} parent=129 // pred_check
          %p551 = pneg %p169
        $region152: #{tpu_custom_call.1} parent=129 // pred_check_branch
          %553 = sbr.rel (%p551) target = $region154
        $region153: #{tpu_custom_call.1} parent=129 // pred_region
          %555 = dma.done [#allocation11], 256
        $region154: #{tpu_custom_call.1} parent=129 // pred_fallthru
          _
        // Predicated region
        $region155: #{tpu_custom_call.1} parent=129 // pred_check
          %p556 = pneg %p190
        $region156: #{tpu_custom_call.1} parent=129 // pred_check_branch
          %558 = sbr.rel (%p556) target = $region158
        $region157: #{tpu_custom_call.1} parent=129 // pred_region
          %560 = dma.done [#allocation11], 256
        $region158: #{tpu_custom_call.1} parent=129 // pred_fallthru
          _
        %s561 = sand.u32 %s41, 1
        %s562 = sand.u32 %s41, 1
        %s563 = smul.addr %s562, 16
        %s564 = scalar_lea.vmem [#allocation2], %s563
        %p565 = pneg %p54
        %p566 = pneg %p51
        %s567 = sand.u32 %s67, 1
        %s568 = sand.u32 %s67, 1
        %s569 = smul.addr %s568, 16
        %s570 = scalar_lea.vmem [#allocation3], %s569
        %p571 = pneg %p80
        %p572 = pneg %p77
        %s573 = sand.u32 %s93, 1
        %s574 = scalar_lea.sflag [#allocation5], %s573
        %s575 = sand.u32 %s93, 1
        %s576 = smul.addr %s575, 16
        %s577 = scalar_lea.vmem [#allocation4], %s576
        %p578 = pneg %p106
        %p579 = pneg %p103
        %p580 = pneg %p127
        %p581 = pneg %p124
        %p582 = pneg %p148
        %p583 = pneg %p145
        %p584 = pneg %p169
        %p585 = pneg %p166
        %p586 = pneg %p190
        %p587 = pneg %p187
        %p588 = pneg %p211
        %p589 = pneg %p208
        %p590 = pneg %p232
        %p591 = pneg %p229
        %p592 = pneg %p258
        %p593 = pneg %p255
        %s594 = sand.u32 %s245, 1
        %s595 = scalar_lea.sflag [#allocation6], %s594
        %s596 = sand.u32 %s245, 1
        %s597 = smul.addr %s596, 32
        %s598 = scalar_lea.vmem [#allocation13], %s597
        %p599 = pneg %p284
        %p600 = pneg %p281
        %s601 = sand.u32 %s271, 1
        %s602 = scalar_lea.sflag [#allocation15], %s601
        %s603 = sand.u32 %s271, 1
        %s604 = smul.addr %s603, 64
        %s605 = scalar_lea.vmem [#allocation14], %s604
        %v607 = vld [vmem:[%s520] sm:$0xf]
        %v608 = vld [vmem:[%s520 + $0x4] sm:$0xf]
        %v609 = vld [vmem:[%s520 + $0x8] sm:$0xf]
        %v610 = vld [vmem:[%s520 + $0xc] sm:$0xf]
        %v611 = vld [vmem:[#allocation7] sm:$0xf]
        %v612 = vld [vmem:[#allocation7 + $0x4] sm:$0xf]
        %v613 = vld [vmem:[#allocation7 + $0x8] sm:$0xf]
        %v614 = vld [vmem:[#allocation7 + $0xc] sm:$0xf]
        %v619 = vunpack.c.l.b16 %v611
        %v620 = vunpack.c.l.b16 %v612
        %v621 = vunpack.c.l.b16 %v613
        %v622 = vunpack.c.l.b16 %v614
        %v623 = vpack.c.b16 %v620, %v619
        %v624 = vpack.c.b16 %v622, %v621
        %v629 = vunpack.c.l.b16 %v607
        %v630 = vunpack.c.l.b16 %v608
        %v631 = vunpack.c.l.b16 %v609
        %v632 = vunpack.c.l.b16 %v610
        %v633 = vpack.c.b16 %v630, %v629
        %v634 = vpack.c.b16 %v632, %v631
        %vm637 = vcmask 261120
        %v639 = vsel %vm637, %v623, 0
        %v642 = vsel %vm637, %v624, 0
        %644 = vmatpush.bf16.msra.mxu0 0
        %645 = vmatpush.bf16.msra.mxu0 0
        %646 = vmatpush.bf16.msra.mxu0 0
        %647 = vmatpush.bf16.msra.mxu0 0
        %648 = vmatpush.bf16.msra.mxu0 0
        %649 = vmatpush.bf16.msra.mxu0 0
        %650 = vmatpush.bf16.msra.mxu0 %v634
        %651 = vmatpush.bf16.msra.mxu0 %v633
        %652 = vmatmul.bf16.gmra.mxu0 %v639
        %v653 = vpop.f32.mrf.mxu0
        %v654 = vadd.f32 0.0, %v653
        %v655 = vpop.f32.mrf.mxu0
        %v656 = vadd.f32 0.0, %v655
        %657 = vmatmul.bf16.gmra.mxu0 %v642
        %v658 = vpop.f32.mrf.mxu0
        %v659 = vadd.f32 0.0, %v658
        %v660 = vpop.f32.mrf.mxu0
        %v661 = vadd.f32 0.0, %v660
        %662 = vdwg.mxu0
        %v663 = vmul.f32 %v654, 0.35355338
        %v664 = vmul.f32 %v656, 0.35355338
        %v665 = vmul.f32 %v659, 0.35355338
        %v666 = vmul.f32 %v661, 0.35355338
        %v667 = vld [vmem:[#allocation9] sm:$0xf]
        %v668 = vld [vmem:[#allocation9 + $0x4] sm:$0xf]
        %v669 = vld [vmem:[#allocation9 + $0x8] sm:$0xf]
        %v670 = vld [vmem:[#allocation9 + $0xc] sm:$0xf]
        %v671 = vld [vmem:[%s527] sm:$0xf]
        %v672 = vld [vmem:[%s527 + $0x4] sm:$0xf]
        %v673 = vld [vmem:[%s527 + $0x8] sm:$0xf]
        %v674 = vld [vmem:[%s527 + $0xc] sm:$0xf]
        %v679 = vunpack.c.l.b16 %v667
        %v680 = vunpack.c.l.b16 %v668
        %v681 = vunpack.c.l.b16 %v669
        %v682 = vunpack.c.l.b16 %v670
        %v683 = vpack.c.b16 %v680, %v679
        %v684 = vpack.c.b16 %v682, %v681
        %v689 = vunpack.c.l.b16 %v671
        %v690 = vunpack.c.l.b16 %v672
        %v691 = vunpack.c.l.b16 %v673
        %v692 = vunpack.c.l.b16 %v674
        %v693 = vpack.c.b16 %v690, %v689
        %v694 = vpack.c.b16 %v692, %v691
        %v698 = vsel %vm637, %v683, 0
        %v701 = vsel %vm637, %v684, 0
        %703 = vmatpush.bf16.msra.mxu0 0
        %704 = vmatpush.bf16.msra.mxu0 0
        %705 = vmatpush.bf16.msra.mxu0 0
        %706 = vmatpush.bf16.msra.mxu0 0
        %707 = vmatpush.bf16.msra.mxu0 0
        %708 = vmatpush.bf16.msra.mxu0 0
        %709 = vmatpush.bf16.msra.mxu0 %v694
        %710 = vmatpush.bf16.msra.mxu0 %v693
        %711 = vmatmul.bf16.gmra.mxu0 %v698
        %v712 = vpop.f32.mrf.mxu0
        %v713 = vadd.f32 0.0, %v712
        %v714 = vpop.f32.mrf.mxu0
        %v715 = vadd.f32 0.0, %v714
        %716 = vmatmul.bf16.gmra.mxu0 %v701
        %v717 = vpop.f32.mrf.mxu0
        %v718 = vadd.f32 0.0, %v717
        %v719 = vpop.f32.mrf.mxu0
        %v720 = vadd.f32 0.0, %v719
        %721 = vdwg.mxu0
        %v722 = vld [vmem:[#allocation10] sm:$0xf]
        %v723 = vld [vmem:[#allocation10 + $0x4] sm:$0xf]
        %v724 = vld [vmem:[#allocation10 + $0x8] sm:$0xf]
        %v725 = vld [vmem:[#allocation10 + $0xc] sm:$0xf]
        %v726 = vld [vmem:[%s535] sm:$0xf]
        %v727 = vld [vmem:[%s535 + $0x4] sm:$0xf]
        %v728 = vld [vmem:[%s535 + $0x8] sm:$0xf]
        %v729 = vld [vmem:[%s535 + $0xc] sm:$0xf]
        %v734 = vunpack.c.l.b16 %v722
        %v735 = vunpack.c.l.b16 %v723
        %v736 = vunpack.c.l.b16 %v724
        %v737 = vunpack.c.l.b16 %v725
        %v738 = vpack.c.b16 %v735, %v734
        %v739 = vpack.c.b16 %v737, %v736
        %v744 = vunpack.c.l.b16 %v726
        %v745 = vunpack.c.l.b16 %v727
        %v746 = vunpack.c.l.b16 %v728
        %v747 = vunpack.c.l.b16 %v729
        %v748 = vpack.c.b16 %v745, %v744
        %v749 = vpack.c.b16 %v747, %v746
        %v753 = vsel %vm637, %v738, 0
        %v756 = vsel %vm637, %v739, 0
        %758 = vmatpush.bf16.msra.mxu0 0
        %759 = vmatpush.bf16.msra.mxu0 0
        %760 = vmatpush.bf16.msra.mxu0 0
        %761 = vmatpush.bf16.msra.mxu0 0
        %762 = vmatpush.bf16.msra.mxu0 0
        %763 = vmatpush.bf16.msra.mxu0 0
        %764 = vmatpush.bf16.msra.mxu0 %v749
        %765 = vmatpush.bf16.msra.mxu0 %v748
        %766 = vmatmul.bf16.gmra.mxu0 %v753
        %v767 = vpop.f32.mrf.mxu0
        %v768 = vadd.f32 0.0, %v767
        %v769 = vpop.f32.mrf.mxu0
        %v770 = vadd.f32 0.0, %v769
        %771 = vmatmul.bf16.gmra.mxu0 %v756
        %v772 = vpop.f32.mrf.mxu0
        %v773 = vadd.f32 0.0, %v772
        %v774 = vpop.f32.mrf.mxu0
        %v775 = vadd.f32 0.0, %v774
        %776 = vdwg.mxu0
        %v778 = vrot.slane %v663, 1
        %v779 = vrot.slane %v663, 2
        %v780 = vrot.slane %v663, 3
        %v781 = vrot.slane %v663, 4
        %v782 = vrot.slane %v663, 5
        %v783 = vrot.slane %v663, 6
        %v784 = vrot.slane %v663, 7
        %v785 = vperm.slane %v663, 0
        %v786 = vperm.slane %v778, 0
        %v787 = vperm.slane %v779, 0
        %v788 = vperm.slane %v780, 0
        %v789 = vperm.slane %v781, 0
        %v790 = vperm.slane %v782, 0
        %v791 = vperm.slane %v783, 0
        %v792 = vperm.slane %v784, 0
        %v801 = vmul.f32 %v785, %v713
        %v802 = vmul.f32 %v786, %v713
        %v803 = vmul.f32 %v787, %v713
        %v804 = vmul.f32 %v788, %v713
        %v805 = vmul.f32 %v789, %v713
        %v806 = vmul.f32 %v790, %v713
        %v807 = vmul.f32 %v791, %v713
        %v808 = vmul.f32 %v792, %v713
        %v809 = vadd.f32 %v801, 0.0
        %v810 = vadd.f32 %v802, 0.0
        %v811 = vadd.f32 %v803, 0.0
        %v812 = vadd.f32 %v804, 0.0
        %v813 = vadd.f32 %v805, 0.0
        %v814 = vadd.f32 %v806, 0.0
        %v815 = vadd.f32 %v807, 0.0
        %v816 = vadd.f32 %v808, 0.0
        %v818 = vrot.slane %v664, 1
        %v819 = vrot.slane %v664, 2
        %v820 = vrot.slane %v664, 3
        %v821 = vrot.slane %v664, 4
        %v822 = vrot.slane %v664, 5
        %v823 = vrot.slane %v664, 6
        %v824 = vrot.slane %v664, 7
        %v825 = vperm.slane %v664, 0
        %v826 = vperm.slane %v818, 0
        %v827 = vperm.slane %v819, 0
        %v828 = vperm.slane %v820, 0
        %v829 = vperm.slane %v821, 0
        %v830 = vperm.slane %v822, 0
        %v831 = vperm.slane %v823, 0
        %v832 = vperm.slane %v824, 0
        %v841 = vmul.f32 %v825, %v715
        %v842 = vmul.f32 %v826, %v715
        %v843 = vmul.f32 %v827, %v715
        %v844 = vmul.f32 %v828, %v715
        %v845 = vmul.f32 %v829, %v715
        %v846 = vmul.f32 %v830, %v715
        %v847 = vmul.f32 %v831, %v715
        %v848 = vmul.f32 %v832, %v715
        %v849 = vadd.f32 %v809, %v841
        %v850 = vadd.f32 %v810, %v842
        %v851 = vadd.f32 %v811, %v843
        %v852 = vadd.f32 %v812, %v844
        %v853 = vadd.f32 %v813, %v845
        %v854 = vadd.f32 %v814, %v846
        %v855 = vadd.f32 %v815, %v847
        %v856 = vadd.f32 %v816, %v848
        %v858 = vrot.slane %v665, 1
        %v859 = vrot.slane %v665, 2
        %v860 = vrot.slane %v665, 3
        %v861 = vrot.slane %v665, 4
        %v862 = vrot.slane %v665, 5
        %v863 = vrot.slane %v665, 6
        %v864 = vrot.slane %v665, 7
        %v865 = vperm.slane %v665, 0
        %v866 = vperm.slane %v858, 0
        %v867 = vperm.slane %v859, 0
        %v868 = vperm.slane %v860, 0
        %v869 = vperm.slane %v861, 0
        %v870 = vperm.slane %v862, 0
        %v871 = vperm.slane %v863, 0
        %v872 = vperm.slane %v864, 0
        %v881 = vmul.f32 %v865, %v718
        %v882 = vmul.f32 %v866, %v718
        %v883 = vmul.f32 %v867, %v718
        %v884 = vmul.f32 %v868, %v718
        %v885 = vmul.f32 %v869, %v718
        %v886 = vmul.f32 %v870, %v718
        %v887 = vmul.f32 %v871, %v718
        %v888 = vmul.f32 %v872, %v718
        %v889 = vadd.f32 %v849, %v881
        %v890 = vadd.f32 %v850, %v882
        %v891 = vadd.f32 %v851, %v883
        %v892 = vadd.f32 %v852, %v884
        %v893 = vadd.f32 %v853, %v885
        %v894 = vadd.f32 %v854, %v886
        %v895 = vadd.f32 %v855, %v887
        %v896 = vadd.f32 %v856, %v888
        %v898 = vrot.slane %v666, 1
        %v899 = vrot.slane %v666, 2
        %v900 = vrot.slane %v666, 3
        %v901 = vrot.slane %v666, 4
        %v902 = vrot.slane %v666, 5
        %v903 = vrot.slane %v666, 6
        %v904 = vrot.slane %v666, 7
        %v905 = vperm.slane %v666, 0
        %v906 = vperm.slane %v898, 0
        %v907 = vperm.slane %v899, 0
        %v908 = vperm.slane %v900, 0
        %v909 = vperm.slane %v901, 0
        %v910 = vperm.slane %v902, 0
        %v911 = vperm.slane %v903, 0
        %v912 = vperm.slane %v904, 0
        %v921 = vmul.f32 %v905, %v720
        %v922 = vmul.f32 %v906, %v720
        %v923 = vmul.f32 %v907, %v720
        %v924 = vmul.f32 %v908, %v720
        %v925 = vmul.f32 %v909, %v720
        %v926 = vmul.f32 %v910, %v720
        %v927 = vmul.f32 %v911, %v720
        %v928 = vmul.f32 %v912, %v720
        %v929 = vadd.f32 %v889, %v921
        %v930 = vadd.f32 %v890, %v922
        %v931 = vadd.f32 %v891, %v923
        %v932 = vadd.f32 %v892, %v924
        %v933 = vadd.f32 %v893, %v925
        %v934 = vadd.f32 %v894, %v926
        %v935 = vadd.f32 %v895, %v927
        %v936 = vadd.f32 %v896, %v928
        %v937 = vrot.slane %v929, 4
        %v938 = vmax.f32 %v929, %v937
        %v939 = vrot.slane %v938, 2
        %v940 = vmax.f32 %v938, %v939
        %v941 = vrot.slane %v940, 1
        %v942 = vmax.f32 %v940, %v941
        %v943 = vrot.slane %v930, 4
        %v944 = vmax.f32 %v930, %v943
        %v945 = vrot.slane %v944, 2
        %v946 = vmax.f32 %v944, %v945
        %v947 = vrot.slane %v946, 1
        %v948 = vmax.f32 %v946, %v947
        %v949 = vrot.slane %v931, 4
        %v950 = vmax.f32 %v931, %v949
        %v951 = vrot.slane %v950, 2
        %v952 = vmax.f32 %v950, %v951
        %v953 = vrot.slane %v952, 1
        %v954 = vmax.f32 %v952, %v953
        %v955 = vrot.slane %v932, 4
        %v956 = vmax.f32 %v932, %v955
        %v957 = vrot.slane %v956, 2
        %v958 = vmax.f32 %v956, %v957
        %v959 = vrot.slane %v958, 1
        %v960 = vmax.f32 %v958, %v959
        %v961 = vrot.slane %v933, 4
        %v962 = vmax.f32 %v933, %v961
        %v963 = vrot.slane %v962, 2
        %v964 = vmax.f32 %v962, %v963
        %v965 = vrot.slane %v964, 1
        %v966 = vmax.f32 %v964, %v965
        %v967 = vrot.slane %v934, 4
        %v968 = vmax.f32 %v934, %v967
        %v969 = vrot.slane %v968, 2
        %v970 = vmax.f32 %v968, %v969
        %v971 = vrot.slane %v970, 1
        %v972 = vmax.f32 %v970, %v971
        %v973 = vrot.slane %v935, 4
        %v974 = vmax.f32 %v935, %v973
        %v975 = vrot.slane %v974, 2
        %v976 = vmax.f32 %v974, %v975
        %v977 = vrot.slane %v976, 1
        %v978 = vmax.f32 %v976, %v977
        %v979 = vrot.slane %v936, 4
        %v980 = vmax.f32 %v936, %v979
        %v981 = vrot.slane %v980, 2
        %v982 = vmax.f32 %v980, %v981
        %v983 = vrot.slane %v982, 1
        %v984 = vmax.f32 %v982, %v983
        %v985 = vsub.f32 %v929, %v942
        %v986 = vsub.f32 %v930, %v948
        %v987 = vsub.f32 %v931, %v954
        %v988 = vsub.f32 %v932, %v960
        %v989 = vsub.f32 %v933, %v966
        %v990 = vsub.f32 %v934, %v972
        %v991 = vsub.f32 %v935, %v978
        %v992 = vsub.f32 %v936, %v984
        %v993 = vmul.f32 %v985, 1.442695
        %v994 = vpow.pop %v993
        %v995 = vmul.f32 %v986, 1.442695
        %v996 = vpow.pop %v995
        %v997 = vmul.f32 %v987, 1.442695
        %v998 = vpow.pop %v997
        %v999 = vmul.f32 %v988, 1.442695
        %v1000 = vpow.pop %v999
        %v1001 = vmul.f32 %v989, 1.442695
        %v1002 = vpow.pop %v1001
        %v1003 = vmul.f32 %v990, 1.442695
        %v1004 = vpow.pop %v1003
        %v1005 = vmul.f32 %v991, 1.442695
        %v1006 = vpow.pop %v1005
        %v1007 = vmul.f32 %v992, 1.442695
        %v1008 = vpow.pop %v1007
        %v1009 = vrot.slane %v994, 4
        %v1010 = vadd.f32 %v994, %v1009
        %v1011 = vrot.slane %v1010, 2
        %v1012 = vadd.f32 %v1010, %v1011
        %v1013 = vrot.slane %v1012, 1
        %v1014 = vadd.f32 %v1012, %v1013
        %v1015 = vrot.slane %v996, 4
        %v1016 = vadd.f32 %v996, %v1015
        %v1017 = vrot.slane %v1016, 2
        %v1018 = vadd.f32 %v1016, %v1017
        %v1019 = vrot.slane %v1018, 1
        %v1020 = vadd.f32 %v1018, %v1019
        %v1021 = vrot.slane %v998, 4
        %v1022 = vadd.f32 %v998, %v1021
        %v1023 = vrot.slane %v1022, 2
        %v1024 = vadd.f32 %v1022, %v1023
        %v1025 = vrot.slane %v1024, 1
        %v1026 = vadd.f32 %v1024, %v1025
        %v1027 = vrot.slane %v1000, 4
        %v1028 = vadd.f32 %v1000, %v1027
        %v1029 = vrot.slane %v1028, 2
        %v1030 = vadd.f32 %v1028, %v1029
        %v1031 = vrot.slane %v1030, 1
        %v1032 = vadd.f32 %v1030, %v1031
        %v1033 = vrot.slane %v1002, 4
        %v1034 = vadd.f32 %v1002, %v1033
        %v1035 = vrot.slane %v1034, 2
        %v1036 = vadd.f32 %v1034, %v1035
        %v1037 = vrot.slane %v1036, 1
        %v1038 = vadd.f32 %v1036, %v1037
        %v1039 = vrot.slane %v1004, 4
        %v1040 = vadd.f32 %v1004, %v1039
        %v1041 = vrot.slane %v1040, 2
        %v1042 = vadd.f32 %v1040, %v1041
        %v1043 = vrot.slane %v1042, 1
        %v1044 = vadd.f32 %v1042, %v1043
        %v1045 = vrot.slane %v1006, 4
        %v1046 = vadd.f32 %v1006, %v1045
        %v1047 = vrot.slane %v1046, 2
        %v1048 = vadd.f32 %v1046, %v1047
        %v1049 = vrot.slane %v1048, 1
        %v1050 = vadd.f32 %v1048, %v1049
        %v1051 = vrot.slane %v1008, 4
        %v1052 = vadd.f32 %v1008, %v1051
        %v1053 = vrot.slane %v1052, 2
        %v1054 = vadd.f32 %v1052, %v1053
        %v1055 = vrot.slane %v1054, 1
        %v1056 = vadd.f32 %v1054, %v1055
        %v1057 = vrcp.pop %v1014
        %v1058 = vmul.f32 %v1014, %v1057
        %v1059 = vsub.f32 1.0, %v1058
        %v1060 = vmul.f32 %v1057, %v1059
        %v1061 = vadd.f32 %v1057, %v1060
        %vm1062 = vweird.f32 %v1014
        %vm1063 = vweird.f32 %v1057
        %vm1064 = vmor %vm1062, %vm1063
        %v1065 = vsel %vm1064, %v1057, %v1061
        %v1066 = vand.u32 2147483647, %v1014
        %vm1067 = vcmp.eq.f32.partialorder %v1066, 8.507059e+37
        %v1068 = vand.u32 %v1014, 2147483648
        %v1069 = vor.u32 1.1754944e-38, %v1068
        %v1070 = vsel %vm1067, %v1069, %v1065
        %v1071 = vmul.f32 1.0, %v1070
        %v1072 = vrcp.pop %v1020
        %v1073 = vmul.f32 %v1020, %v1072
        %v1074 = vsub.f32 1.0, %v1073
        %v1075 = vmul.f32 %v1072, %v1074
        %v1076 = vadd.f32 %v1072, %v1075
        %vm1077 = vweird.f32 %v1020
        %vm1078 = vweird.f32 %v1072
        %vm1079 = vmor %vm1077, %vm1078
        %v1080 = vsel %vm1079, %v1072, %v1076
        %v1081 = vand.u32 2147483647, %v1020
        %vm1082 = vcmp.eq.f32.partialorder %v1081, 8.507059e+37
        %v1083 = vand.u32 %v1020, 2147483648
        %v1084 = vor.u32 1.1754944e-38, %v1083
        %v1085 = vsel %vm1082, %v1084, %v1080
        %v1086 = vmul.f32 1.0, %v1085
        %v1087 = vrcp.pop %v1026
        %v1088 = vmul.f32 %v1026, %v1087
        %v1089 = vsub.f32 1.0, %v1088
        %v1090 = vmul.f32 %v1087, %v1089
        %v1091 = vadd.f32 %v1087, %v1090
        %vm1092 = vweird.f32 %v1026
        %vm1093 = vweird.f32 %v1087
        %vm1094 = vmor %vm1092, %vm1093
        %v1095 = vsel %vm1094, %v1087, %v1091
        %v1096 = vand.u32 2147483647, %v1026
        %vm1097 = vcmp.eq.f32.partialorder %v1096, 8.507059e+37
        %v1098 = vand.u32 %v1026, 2147483648
        %v1099 = vor.u32 1.1754944e-38, %v1098
        %v1100 = vsel %vm1097, %v1099, %v1095
        %v1101 = vmul.f32 1.0, %v1100
        %v1102 = vrcp.pop %v1032
        %v1103 = vmul.f32 %v1032, %v1102
        %v1104 = vsub.f32 1.0, %v1103
        %v1105 = vmul.f32 %v1102, %v1104
        %v1106 = vadd.f32 %v1102, %v1105
        %vm1107 = vweird.f32 %v1032
        %vm1108 = vweird.f32 %v1102
        %vm1109 = vmor %vm1107, %vm1108
        %v1110 = vsel %vm1109, %v1102, %v1106
        %v1111 = vand.u32 2147483647, %v1032
        %vm1112 = vcmp.eq.f32.partialorder %v1111, 8.507059e+37
        %v1113 = vand.u32 %v1032, 2147483648
        %v1114 = vor.u32 1.1754944e-38, %v1113
        %v1115 = vsel %vm1112, %v1114, %v1110
        %v1116 = vmul.f32 1.0, %v1115
        %v1117 = vrcp.pop %v1038
        %v1118 = vmul.f32 %v1038, %v1117
        %v1119 = vsub.f32 1.0, %v1118
        %v1120 = vmul.f32 %v1117, %v1119
        %v1121 = vadd.f32 %v1117, %v1120
        %vm1122 = vweird.f32 %v1038
        %vm1123 = vweird.f32 %v1117
        %vm1124 = vmor %vm1122, %vm1123
        %v1125 = vsel %vm1124, %v1117, %v1121
        %v1126 = vand.u32 2147483647, %v1038
        %vm1127 = vcmp.eq.f32.partialorder %v1126, 8.507059e+37
        %v1128 = vand.u32 %v1038, 2147483648
        %v1129 = vor.u32 1.1754944e-38, %v1128
        %v1130 = vsel %vm1127, %v1129, %v1125
        %v1131 = vmul.f32 1.0, %v1130
        %v1132 = vrcp.pop %v1044
        %v1133 = vmul.f32 %v1044, %v1132
        %v1134 = vsub.f32 1.0, %v1133
        %v1135 = vmul.f32 %v1132, %v1134
        %v1136 = vadd.f32 %v1132, %v1135
        %vm1137 = vweird.f32 %v1044
        %vm1138 = vweird.f32 %v1132
        %vm1139 = vmor %vm1137, %vm1138
        %v1140 = vsel %vm1139, %v1132, %v1136
        %v1141 = vand.u32 2147483647, %v1044
        %vm1142 = vcmp.eq.f32.partialorder %v1141, 8.507059e+37
        %v1143 = vand.u32 %v1044, 2147483648
        %v1144 = vor.u32 1.1754944e-38, %v1143
        %v1145 = vsel %vm1142, %v1144, %v1140
        %v1146 = vmul.f32 1.0, %v1145
        %v1147 = vrcp.pop %v1050
        %v1148 = vmul.f32 %v1050, %v1147
        %v1149 = vsub.f32 1.0, %v1148
        %v1150 = vmul.f32 %v1147, %v1149
        %v1151 = vadd.f32 %v1147, %v1150
        %vm1152 = vweird.f32 %v1050
        %vm1153 = vweird.f32 %v1147
        %vm1154 = vmor %vm1152, %vm1153
        %v1155 = vsel %vm1154, %v1147, %v1151
        %v1156 = vand.u32 2147483647, %v1050
        %vm1157 = vcmp.eq.f32.partialorder %v1156, 8.507059e+37
        %v1158 = vand.u32 %v1050, 2147483648
        %v1159 = vor.u32 1.1754944e-38, %v1158
        %v1160 = vsel %vm1157, %v1159, %v1155
        %v1161 = vmul.f32 1.0, %v1160
        %v1162 = vrcp.pop %v1056
        %v1163 = vmul.f32 %v1056, %v1162
        %v1164 = vsub.f32 1.0, %v1163
        %v1165 = vmul.f32 %v1162, %v1164
        %v1166 = vadd.f32 %v1162, %v1165
        %vm1167 = vweird.f32 %v1056
        %vm1168 = vweird.f32 %v1162
        %vm1169 = vmor %vm1167, %vm1168
        %v1170 = vsel %vm1169, %v1162, %v1166
        %v1171 = vand.u32 2147483647, %v1056
        %vm1172 = vcmp.eq.f32.partialorder %v1171, 8.507059e+37
        %v1173 = vand.u32 %v1056, 2147483648
        %v1174 = vor.u32 1.1754944e-38, %v1173
        %v1175 = vsel %vm1172, %v1174, %v1170
        %v1176 = vmul.f32 1.0, %v1175
        %v1177 = vmul.f32 %v994, %v1071
        %v1178 = vmul.f32 %v996, %v1086
        %v1179 = vmul.f32 %v998, %v1101
        %v1180 = vmul.f32 %v1000, %v1116
        %v1181 = vmul.f32 %v1002, %v1131
        %v1182 = vmul.f32 %v1004, %v1146
        %v1183 = vmul.f32 %v1006, %v1161
        %v1184 = vmul.f32 %v1008, %v1176
        %1185 = vst [vmem:[%s605] sm:$0xff] %v1177
        %1186 = vst [vmem:[%s605 + $0x8] sm:$0xff] %v1178
        %1187 = vst [vmem:[%s605 + $0x10] sm:$0xff] %v1179
        %1188 = vst [vmem:[%s605 + $0x18] sm:$0xff] %v1180
        %1189 = vst [vmem:[%s605 + $0x20] sm:$0xff] %v1181
        %1190 = vst [vmem:[%s605 + $0x28] sm:$0xff] %v1182
        %1191 = vst [vmem:[%s605 + $0x30] sm:$0xff] %v1183
        %1192 = vst [vmem:[%s605 + $0x38] sm:$0xff] %v1184
        %v1193 = vmul.f32 %v1177, %v768
        %v1194 = vmul.f32 %v1178, %v768
        %v1195 = vmul.f32 %v1179, %v768
        %v1196 = vmul.f32 %v1180, %v768
        %v1197 = vmul.f32 %v1181, %v768
        %v1198 = vmul.f32 %v1182, %v768
        %v1199 = vmul.f32 %v1183, %v768
        %v1200 = vmul.f32 %v1184, %v768
        %v1201 = vrot.slane %v1193, 4
        %v1202 = vadd.f32 %v1193, %v1201
        %v1203 = vrot.slane %v1202, 2
        %v1204 = vadd.f32 %v1202, %v1203
        %v1205 = vrot.slane %v1204, 1
        %v1206 = vadd.f32 %v1204, %v1205
        %v1207 = vrot.slane %v1194, 4
        %v1208 = vadd.f32 %v1194, %v1207
        %v1209 = vrot.slane %v1208, 2
        %v1210 = vadd.f32 %v1208, %v1209
        %v1211 = vrot.slane %v1210, 1
        %v1212 = vadd.f32 %v1210, %v1211
        %v1213 = vrot.slane %v1195, 4
        %v1214 = vadd.f32 %v1195, %v1213
        %v1215 = vrot.slane %v1214, 2
        %v1216 = vadd.f32 %v1214, %v1215
        %v1217 = vrot.slane %v1216, 1
        %v1218 = vadd.f32 %v1216, %v1217
        %v1219 = vrot.slane %v1196, 4
        %v1220 = vadd.f32 %v1196, %v1219
        %v1221 = vrot.slane %v1220, 2
        %v1222 = vadd.f32 %v1220, %v1221
        %v1223 = vrot.slane %v1222, 1
        %v1224 = vadd.f32 %v1222, %v1223
        %v1225 = vrot.slane %v1197, 4
        %v1226 = vadd.f32 %v1197, %v1225
        %v1227 = vrot.slane %v1226, 2
        %v1228 = vadd.f32 %v1226, %v1227
        %v1229 = vrot.slane %v1228, 1
        %v1230 = vadd.f32 %v1228, %v1229
        %v1231 = vrot.slane %v1198, 4
        %v1232 = vadd.f32 %v1198, %v1231
        %v1233 = vrot.slane %v1232, 2
        %v1234 = vadd.f32 %v1232, %v1233
        %v1235 = vrot.slane %v1234, 1
        %v1236 = vadd.f32 %v1234, %v1235
        %v1237 = vrot.slane %v1199, 4
        %v1238 = vadd.f32 %v1199, %v1237
        %v1239 = vrot.slane %v1238, 2
        %v1240 = vadd.f32 %v1238, %v1239
        %v1241 = vrot.slane %v1240, 1
        %v1242 = vadd.f32 %v1240, %v1241
        %v1243 = vrot.slane %v1200, 4
        %v1244 = vadd.f32 %v1200, %v1243
        %v1245 = vrot.slane %v1244, 2
        %v1246 = vadd.f32 %v1244, %v1245
        %v1247 = vrot.slane %v1246, 1
        %v1248 = vadd.f32 %v1246, %v1247
        %v1249 = vmul.f32 %v1177, %v770
        %v1250 = vmul.f32 %v1178, %v770
        %v1251 = vmul.f32 %v1179, %v770
        %v1252 = vmul.f32 %v1180, %v770
        %v1253 = vmul.f32 %v1181, %v770
        %v1254 = vmul.f32 %v1182, %v770
        %v1255 = vmul.f32 %v1183, %v770
        %v1256 = vmul.f32 %v1184, %v770
        %v1257 = vrot.slane %v1249, 4
        %v1258 = vadd.f32 %v1249, %v1257
        %v1259 = vrot.slane %v1258, 2
        %v1260 = vadd.f32 %v1258, %v1259
        %v1261 = vrot.slane %v1260, 1
        %v1262 = vadd.f32 %v1260, %v1261
        %v1263 = vrot.slane %v1250, 4
        %v1264 = vadd.f32 %v1250, %v1263
        %v1265 = vrot.slane %v1264, 2
        %v1266 = vadd.f32 %v1264, %v1265
        %v1267 = vrot.slane %v1266, 1
        %v1268 = vadd.f32 %v1266, %v1267
        %v1269 = vrot.slane %v1251, 4
        %v1270 = vadd.f32 %v1251, %v1269
        %v1271 = vrot.slane %v1270, 2
        %v1272 = vadd.f32 %v1270, %v1271
        %v1273 = vrot.slane %v1272, 1
        %v1274 = vadd.f32 %v1272, %v1273
        %v1275 = vrot.slane %v1252, 4
        %v1276 = vadd.f32 %v1252, %v1275
        %v1277 = vrot.slane %v1276, 2
        %v1278 = vadd.f32 %v1276, %v1277
        %v1279 = vrot.slane %v1278, 1
        %v1280 = vadd.f32 %v1278, %v1279
        %v1281 = vrot.slane %v1253, 4
        %v1282 = vadd.f32 %v1253, %v1281
        %v1283 = vrot.slane %v1282, 2
        %v1284 = vadd.f32 %v1282, %v1283
        %v1285 = vrot.slane %v1284, 1
        %v1286 = vadd.f32 %v1284, %v1285
        %v1287 = vrot.slane %v1254, 4
        %v1288 = vadd.f32 %v1254, %v1287
        %v1289 = vrot.slane %v1288, 2
        %v1290 = vadd.f32 %v1288, %v1289
        %v1291 = vrot.slane %v1290, 1
        %v1292 = vadd.f32 %v1290, %v1291
        %v1293 = vrot.slane %v1255, 4
        %v1294 = vadd.f32 %v1255, %v1293
        %v1295 = vrot.slane %v1294, 2
        %v1296 = vadd.f32 %v1294, %v1295
        %v1297 = vrot.slane %v1296, 1
        %v1298 = vadd.f32 %v1296, %v1297
        %v1299 = vrot.slane %v1256, 4
        %v1300 = vadd.f32 %v1256, %v1299
        %v1301 = vrot.slane %v1300, 2
        %v1302 = vadd.f32 %v1300, %v1301
        %v1303 = vrot.slane %v1302, 1
        %v1304 = vadd.f32 %v1302, %v1303
        %v1305 = vmul.f32 %v1177, %v773
        %v1306 = vmul.f32 %v1178, %v773
        %v1307 = vmul.f32 %v1179, %v773
        %v1308 = vmul.f32 %v1180, %v773
        %v1309 = vmul.f32 %v1181, %v773
        %v1310 = vmul.f32 %v1182, %v773
        %v1311 = vmul.f32 %v1183, %v773
        %v1312 = vmul.f32 %v1184, %v773
        %v1313 = vrot.slane %v1305, 4
        %v1314 = vadd.f32 %v1305, %v1313
        %v1315 = vrot.slane %v1314, 2
        %v1316 = vadd.f32 %v1314, %v1315
        %v1317 = vrot.slane %v1316, 1
        %v1318 = vadd.f32 %v1316, %v1317
        %v1319 = vrot.slane %v1306, 4
        %v1320 = vadd.f32 %v1306, %v1319
        %v1321 = vrot.slane %v1320, 2
        %v1322 = vadd.f32 %v1320, %v1321
        %v1323 = vrot.slane %v1322, 1
        %v1324 = vadd.f32 %v1322, %v1323
        %v1325 = vrot.slane %v1307, 4
        %v1326 = vadd.f32 %v1307, %v1325
        %v1327 = vrot.slane %v1326, 2
        %v1328 = vadd.f32 %v1326, %v1327
        %v1329 = vrot.slane %v1328, 1
        %v1330 = vadd.f32 %v1328, %v1329
        %v1331 = vrot.slane %v1308, 4
        %v1332 = vadd.f32 %v1308, %v1331
        %v1333 = vrot.slane %v1332, 2
        %v1334 = vadd.f32 %v1332, %v1333
        %v1335 = vrot.slane %v1334, 1
        %v1336 = vadd.f32 %v1334, %v1335
        %v1337 = vrot.slane %v1309, 4
        %v1338 = vadd.f32 %v1309, %v1337
        %v1339 = vrot.slane %v1338, 2
        %v1340 = vadd.f32 %v1338, %v1339
        %v1341 = vrot.slane %v1340, 1
        %v1342 = vadd.f32 %v1340, %v1341
        %v1343 = vrot.slane %v1310, 4
        %v1344 = vadd.f32 %v1310, %v1343
        %v1345 = vrot.slane %v1344, 2
        %v1346 = vadd.f32 %v1344, %v1345
        %v1347 = vrot.slane %v1346, 1
        %v1348 = vadd.f32 %v1346, %v1347
        %v1349 = vrot.slane %v1311, 4
        %v1350 = vadd.f32 %v1311, %v1349
        %v1351 = vrot.slane %v1350, 2
        %v1352 = vadd.f32 %v1350, %v1351
        %v1353 = vrot.slane %v1352, 1
        %v1354 = vadd.f32 %v1352, %v1353
        %v1355 = vrot.slane %v1312, 4
        %v1356 = vadd.f32 %v1312, %v1355
        %v1357 = vrot.slane %v1356, 2
        %v1358 = vadd.f32 %v1356, %v1357
        %v1359 = vrot.slane %v1358, 1
        %v1360 = vadd.f32 %v1358, %v1359
        %v1361 = vmul.f32 %v1177, %v775
        %v1362 = vmul.f32 %v1178, %v775
        %v1363 = vmul.f32 %v1179, %v775
        %v1364 = vmul.f32 %v1180, %v775
        %v1365 = vmul.f32 %v1181, %v775
        %v1366 = vmul.f32 %v1182, %v775
        %v1367 = vmul.f32 %v1183, %v775
        %v1368 = vmul.f32 %v1184, %v775
        %v1369 = vrot.slane %v1361, 4
        %v1370 = vadd.f32 %v1361, %v1369
        %v1371 = vrot.slane %v1370, 2
        %v1372 = vadd.f32 %v1370, %v1371
        %v1373 = vrot.slane %v1372, 1
        %v1374 = vadd.f32 %v1372, %v1373
        %v1375 = vrot.slane %v1362, 4
        %v1376 = vadd.f32 %v1362, %v1375
        %v1377 = vrot.slane %v1376, 2
        %v1378 = vadd.f32 %v1376, %v1377
        %v1379 = vrot.slane %v1378, 1
        %v1380 = vadd.f32 %v1378, %v1379
        %v1381 = vrot.slane %v1363, 4
        %v1382 = vadd.f32 %v1363, %v1381
        %v1383 = vrot.slane %v1382, 2
        %v1384 = vadd.f32 %v1382, %v1383
        %v1385 = vrot.slane %v1384, 1
        %v1386 = vadd.f32 %v1384, %v1385
        %v1387 = vrot.slane %v1364, 4
        %v1388 = vadd.f32 %v1364, %v1387
        %v1389 = vrot.slane %v1388, 2
        %v1390 = vadd.f32 %v1388, %v1389
        %v1391 = vrot.slane %v1390, 1
        %v1392 = vadd.f32 %v1390, %v1391
        %v1393 = vrot.slane %v1365, 4
        %v1394 = vadd.f32 %v1365, %v1393
        %v1395 = vrot.slane %v1394, 2
        %v1396 = vadd.f32 %v1394, %v1395
        %v1397 = vrot.slane %v1396, 1
        %v1398 = vadd.f32 %v1396, %v1397
        %v1399 = vrot.slane %v1366, 4
        %v1400 = vadd.f32 %v1366, %v1399
        %v1401 = vrot.slane %v1400, 2
        %v1402 = vadd.f32 %v1400, %v1401
        %v1403 = vrot.slane %v1402, 1
        %v1404 = vadd.f32 %v1402, %v1403
        %v1405 = vrot.slane %v1367, 4
        %v1406 = vadd.f32 %v1367, %v1405
        %v1407 = vrot.slane %v1406, 2
        %v1408 = vadd.f32 %v1406, %v1407
        %v1409 = vrot.slane %v1408, 1
        %v1410 = vadd.f32 %v1408, %v1409
        %v1411 = vrot.slane %v1368, 4
        %v1412 = vadd.f32 %v1368, %v1411
        %v1413 = vrot.slane %v1412, 2
        %v1414 = vadd.f32 %v1412, %v1413
        %v1415 = vrot.slane %v1414, 1
        %v1416 = vadd.f32 %v1414, %v1415
        %vm1425 = vcmask 1041409
        %v1426 = vsel %vm1425, %v1212, %v1206
        %vm1427 = vcmask 1042434
        %v1428 = vsel %vm1427, %v1218, %v1426
        %vm1429 = vcmask 1043459
        %v1430 = vsel %vm1429, %v1224, %v1428
        %vm1431 = vcmask 1044484
        %v1432 = vsel %vm1431, %v1230, %v1430
        %vm1433 = vcmask 1045509
        %v1434 = vsel %vm1433, %v1236, %v1432
        %vm1435 = vcmask 1046534
        %v1436 = vsel %vm1435, %v1242, %v1434
        %vm1437 = vcmask 1047559
        %v1438 = vsel %vm1437, %v1248, %v1436
        %v1448 = vsel %vm1425, %v1268, %v1262
        %v1449 = vsel %vm1427, %v1274, %v1448
        %v1450 = vsel %vm1429, %v1280, %v1449
        %v1451 = vsel %vm1431, %v1286, %v1450
        %v1452 = vsel %vm1433, %v1292, %v1451
        %v1453 = vsel %vm1435, %v1298, %v1452
        %v1454 = vsel %vm1437, %v1304, %v1453
        %v1464 = vsel %vm1425, %v1324, %v1318
        %v1465 = vsel %vm1427, %v1330, %v1464
        %v1466 = vsel %vm1429, %v1336, %v1465
        %v1467 = vsel %vm1431, %v1342, %v1466
        %v1468 = vsel %vm1433, %v1348, %v1467
        %v1469 = vsel %vm1435, %v1354, %v1468
        %v1470 = vsel %vm1437, %v1360, %v1469
        %v1480 = vsel %vm1425, %v1380, %v1374
        %v1481 = vsel %vm1427, %v1386, %v1480
        %v1482 = vsel %vm1429, %v1392, %v1481
        %v1483 = vsel %vm1431, %v1398, %v1482
        %v1484 = vsel %vm1433, %v1404, %v1483
        %v1485 = vsel %vm1435, %v1410, %v1484
        %v1486 = vsel %vm1437, %v1416, %v1485
        %v1488 = vld [vmem:[#allocation12] sm:$0xf]
        %v1489 = vld [vmem:[#allocation12 + $0x4] sm:$0xf]
        %v1490 = vld [vmem:[#allocation12 + $0x8] sm:$0xf]
        %v1491 = vld [vmem:[#allocation12 + $0xc] sm:$0xf]
        %v1492 = vunpack.c.l.bf16 %v1488
        %v1493 = vunpack.c.l.bf16 %v1489
        %v1494 = vunpack.c.l.bf16 %v1490
        %v1495 = vunpack.c.l.bf16 %v1491
        %v1496 = vunpack.c.l.bf16 %v607
        %v1497 = vunpack.c.l.bf16 %v608
        %v1498 = vunpack.c.l.bf16 %v609
        %v1499 = vunpack.c.l.bf16 %v610
        %v1501 = vsel %vm637, %v1492, 0
        %v1504 = vsel %vm637, %v1493, 0
        %v1507 = vsel %vm637, %v1494, 0
        %v1510 = vsel %vm637, %v1495, 0
        %1512 = vmatpush.msra.mxu0 0.0
        %1513 = vmatpush.msra.mxu0 0.0
        %1514 = vmatpush.msra.mxu0 0.0
        %1515 = vmatpush.msra.mxu0 0.0
        %1516 = vmatpush.msra.mxu0 0.0
        %1517 = vmatpush.msra.mxu0 0.0
        %1518 = vmatpush.msra.mxu0 0.0
        %1519 = vmatpush.msra.mxu0 0.0
        %1520 = vmatpush.msra.mxu0 0.0
        %1521 = vmatpush.msra.mxu0 0.0
        %1522 = vmatpush.msra.mxu0 0.0
        %1523 = vmatpush.msra.mxu0 0.0
        %1524 = vmatpush.msra.mxu0 %v1486
        %1525 = vmatpush.msra.mxu0 %v1470
        %1526 = vmatpush.msra.mxu0 %v1454
        %1527 = vmatpush.msra.mxu0 %v1438
        %1528 = vmatmul.f32.gmra.mxu0 %v1501
        %v1529 = vpop.f32.mrf.mxu0
        %v1530 = vadd.f32 %v1496, %v1529
        %1531 = vmatmul.f32.gmra.mxu0 %v1504
        %v1532 = vpop.f32.mrf.mxu0
        %v1533 = vadd.f32 %v1497, %v1532
        %1534 = vmatmul.f32.gmra.mxu0 %v1507
        %v1535 = vpop.f32.mrf.mxu0
        %v1536 = vadd.f32 %v1498, %v1535
        %1537 = vmatmul.f32.gmra.mxu0 %v1510
        %v1538 = vpop.f32.mrf.mxu0
        %v1539 = vadd.f32 %v1499, %v1538
        %1540 = vdwg.mxu0
        %v1541 = vadd.f32 %v1530, %v1533
        %v1542 = vadd.f32 %v1541, %v1536
        %v1543 = vadd.f32 %v1542, %v1539
        %v1544 = vrot.slane %v1543, 4
        %v1545 = vadd.f32 %v1543, %v1544
        %v1546 = vrot.slane %v1545, 2
        %v1547 = vadd.f32 %v1545, %v1546
        %v1548 = vrot.slane %v1547, 1
        %v1549 = vadd.f32 %v1547, %v1548
        %v1550 = vmul.f32 %v1549, 0.03125
        %v1551 = vsub.f32 %v1530, %v1550
        %v1552 = vsub.f32 %v1533, %v1550
        %v1553 = vsub.f32 %v1536, %v1550
        %v1554 = vsub.f32 %v1539, %v1550
        %v1555 = vmul.f32 %v1551, %v1551
        %v1556 = vmul.f32 %v1552, %v1552
        %v1557 = vmul.f32 %v1553, %v1553
        %v1558 = vmul.f32 %v1554, %v1554
        %v1559 = vadd.f32 %v1555, %v1556
        %v1560 = vadd.f32 %v1559, %v1557
        %v1561 = vadd.f32 %v1560, %v1558
        %v1562 = vrot.slane %v1561, 4
        %v1563 = vadd.f32 %v1561, %v1562
        %v1564 = vrot.slane %v1563, 2
        %v1565 = vadd.f32 %v1563, %v1564
        %v1566 = vrot.slane %v1565, 1
        %v1567 = vadd.f32 %v1565, %v1566
        %v1568 = vmul.f32 %v1567, 0.03125
        %v1569 = vadd.f32 %v1568, 1e-06
        %v1570 = vrsqrt.pop %v1569
        %v1571 = vmul.f32 %v1570, %v1569
        %v1572 = vmul.f32 %v1571, %v1570
        %v1573 = vmul.f32 0.5, %v1572
        %v1574 = vsub.f32 1.5, %v1573
        %v1575 = vmul.f32 %v1570, %v1574
        %vm1576 = vweird.f32 %v1569
        %vm1577 = vweird.f32 %v1570
        %vm1578 = vmor %vm1576, %vm1577
        %v1579 = vsel %vm1578, %v1570, %v1575
        %v1580 = vmul.f32 %v1551, %v1579
        %v1581 = vmul.f32 %v1552, %v1579
        %v1582 = vmul.f32 %v1553, %v1579
        %v1583 = vmul.f32 %v1554, %v1579
        %v1584 = vld [vmem:[%s7] sm:$0xff]
        %v1585 = vld [vmem:[%s7 + $0x8] sm:$0xff]
        %v1586 = vld [vmem:[%s7 + $0x10] sm:$0xff]
        %v1587 = vld [vmem:[%s7 + $0x18] sm:$0xff]
        %1589 = vset.pattern.permute.xlu0 0
        %1590 = vperm.xlu0 %1589, %v1584
        %v1591 = vpop.permute.xlu0 %1590
        %1594 = vset.pattern.permute.xlu0 0
        %1595 = vperm.xlu0 %1594, %v1585
        %v1596 = vpop.permute.xlu0 %1595
        %1599 = vset.pattern.permute.xlu0 0
        %1600 = vperm.xlu0 %1599, %v1586
        %v1601 = vpop.permute.xlu0 %1600
        %1604 = vset.pattern.permute.xlu0 0
        %1605 = vperm.xlu0 %1604, %v1587
        %v1606 = vpop.permute.xlu0 %1605
        %v1608 = vmul.f32 %v1580, %v1591
        %v1609 = vmul.f32 %v1581, %v1596
        %v1610 = vmul.f32 %v1582, %v1601
        %v1611 = vmul.f32 %v1583, %v1606
        %v1612 = vld [vmem:[%s8] sm:$0xff]
        %v1613 = vld [vmem:[%s8 + $0x8] sm:$0xff]
        %v1614 = vld [vmem:[%s8 + $0x10] sm:$0xff]
        %v1615 = vld [vmem:[%s8 + $0x18] sm:$0xff]
        %1617 = vset.pattern.permute.xlu0 0
        %1618 = vperm.xlu0 %1617, %v1612
        %v1619 = vpop.permute.xlu0 %1618
        %1622 = vset.pattern.permute.xlu0 0
        %1623 = vperm.xlu0 %1622, %v1613
        %v1624 = vpop.permute.xlu0 %1623
        %1627 = vset.pattern.permute.xlu0 0
        %1628 = vperm.xlu0 %1627, %v1614
        %v1629 = vpop.permute.xlu0 %1628
        %1632 = vset.pattern.permute.xlu0 0
        %1633 = vperm.xlu0 %1632, %v1615
        %v1634 = vpop.permute.xlu0 %1633
        %v1636 = vadd.f32 %v1608, %v1619
        %v1637 = vadd.f32 %v1609, %v1624
        %v1638 = vadd.f32 %v1610, %v1629
        %v1639 = vadd.f32 %v1611, %v1634
        %1640 = vst [vmem:[%s598] sm:$0xff] %v1636
        %1641 = vst [vmem:[%s598 + $0x8] sm:$0xff] %v1637
        %1642 = vst [vmem:[%s598 + $0x10] sm:$0xff] %v1638
        %1643 = vst [vmem:[%s598 + $0x18] sm:$0xff] %v1639
        %s1644 = sand.u32 %s245, 1
        %s1645 = scalar_lea.sflag [#allocation6], %s1644
        %s1646 = sand.u32 %s245, 1
        %s1647 = smul.addr %s1646, 32
        %s1648 = scalar_lea.vmem [#allocation13], %s1647
        %s1649 = sand.u32 %s271, 1
        %s1650 = scalar_lea.sflag [#allocation15], %s1649
        %s1651 = sand.u32 %s271, 1
        %s1652 = smul.addr %s1651, 64
        %s1653 = scalar_lea.vmem [#allocation14], %s1652
        // Predicated region
        $region159: #{tpu_custom_call.1} parent=129 // pred_check
          %p1654 = pneg %p255
        $region160: #{tpu_custom_call.1} parent=129 // pred_check_branch
          %1656 = sbr.rel (%p1654) target = $region162
        $region161: #{tpu_custom_call.1} parent=129 // pred_region
          %1658 = vsyncadd %s1645, 0
          %s1659 = smul.addr %s33, 8
          %s1660 = scalar_lea.hbm %s9, %s1659
          %s1661 = sshll.u32 %s1648, 4
          %s1662 = int_to_ptr.vmem [resolvable:$true] %s1661
          %s1663 = sshll.u32 %s1660, 4
          %s1664 = int_to_ptr.hbm [resolvable:$true] %s1663
          %1669 = dma.vmem_to_hbm [thread:$0]  %s1662, 512, %s1664, %s1645, 128, 256, 8
        $region162: #{tpu_custom_call.1} parent=129 // pred_fallthru
          _
        // Predicated region
        $region163: #{tpu_custom_call.1} parent=129 // pred_check
          %p1670 = pneg %p281
        $region164: #{tpu_custom_call.1} parent=129 // pred_check_branch
          %1672 = sbr.rel (%p1670) target = $region166
        $region165: #{tpu_custom_call.1} parent=129 // pred_region
          %1674 = vsyncadd %s1650, 0
          %s1675 = smul.addr %s33, 8
          %s1676 = scalar_lea.hbm %s10, %s1675
          %s1677 = sshll.u32 %s1653, 4
          %s1678 = int_to_ptr.vmem [resolvable:$true] %s1677
          %s1679 = sshll.u32 %s1676, 4
          %s1680 = int_to_ptr.hbm [resolvable:$true] %s1679
          %1685 = dma.vmem_to_hbm [thread:$0]  %s1678, 1024, %s1680, %s1650, 128, 256, 8
        $region166: #{tpu_custom_call.1} parent=129 // pred_fallthru
          _
      $region130: #{tpu_custom_call.1} parent=5 // pred_fallthru
        _
      %p1686 = scmp.le.s32.totalorder 2, %s28
      // Predicated region
      $region167: #{tpu_custom_call.1} parent=5 // pred_check
        %p1687 = pneg %p1686
      $region168: #{tpu_custom_call.1} parent=5 // pred_check_branch
        %1689 = sbr.rel (%p1687) target = $region170
      $region169: #{tpu_custom_call.1} parent=5 // pred_region
        %s1690 = ssub.s32 %s28, 2
        // Predicated region
        $region171: #{tpu_custom_call.1} parent=169 // pred_check
          %p1691 = pneg %p261
        $region172: #{tpu_custom_call.1} parent=169 // pred_check_branch
          %1693 = sbr.rel (%p1691) target = $region174
        $region173: #{tpu_custom_call.1} parent=169 // pred_region
          %s1694 = sand.u32 %s246, 1
          %s1695 = scalar_lea.sflag [#allocation6], %s1694
          %s1696 = sand.u32 %s246, 1
          %s1697 = smul.addr %s1696, 32
          %s1698 = scalar_lea.vmem [#allocation13], %s1697
          %1700 = dma.done %s1695, 512
        $region174: #{tpu_custom_call.1} parent=169 // pred_fallthru
          _
        // Predicated region
        $region175: #{tpu_custom_call.1} parent=169 // pred_check
          %p1701 = pneg %p287
        $region176: #{tpu_custom_call.1} parent=169 // pred_check_branch
          %1703 = sbr.rel (%p1701) target = $region178
        $region177: #{tpu_custom_call.1} parent=169 // pred_region
          %s1704 = sand.u32 %s272, 1
          %s1705 = scalar_lea.sflag [#allocation15], %s1704
          %s1706 = sand.u32 %s272, 1
          %s1707 = smul.addr %s1706, 64
          %s1708 = scalar_lea.vmem [#allocation14], %s1707
          %1710 = dma.done %s1705, 1024
        $region178: #{tpu_custom_call.1} parent=169 // pred_fallthru
          _
      $region170: #{tpu_custom_call.1} parent=5 // pred_fallthru
        _
    $region6: #{tpu_custom_call.1} parent=1 // loop_footer
      %s32 = sadd.s32 1, %s28
    $region7: #{tpu_custom_call.1} parent=1 // loop_footer_branch
      %27 = sbr.rel target = $region3
    $region8: #{tpu_custom_call.1} parent=1 // loop_exit
      _
    %1711 = vsyncpa [#allocation5], 1
    %s1712 = scalar_lea.sflag [#allocation5], 1
    %1713 = vsyncpa %s1712, 1
    %1714 = vsyncpa [#allocation8], 1
    %1715 = vsyncpa [#allocation11], 1
    %1716 = vsyncpa [#allocation6], 1
    %s1717 = scalar_lea.sflag [#allocation6], 1
    %1718 = vsyncpa %s1717, 1
    %1719 = vsyncpa [#allocation15], 1
    %s1720 = scalar_lea.sflag [#allocation15], 1
    %1721 = vsyncpa %s1720, 1

</llo_original>
